<compile_context>
chip_gen: v7x
topology: tpu7x:2x2x1
jax: 0.10.0
libtpu: 0.0.40
codegen_flags: <defaults>
</compile_context>

<pallas_src>
import jax
import jax.numpy as jnp
from jax.experimental import pallas as pl
from jax.experimental.pallas import tpu as pltpu


_VMEM = pl.BlockSpec(memory_space=pltpu.MemorySpace.VMEM)
_SMEM = pl.BlockSpec(memory_space=pltpu.MemorySpace.SMEM)


# ---------------------------------------------------------------------------
# Fused kernel
# ---------------------------------------------------------------------------

def _make_fused_kernel(ce_eps, ce_weights, bce_weight, n_pairs, clip_loss_enabled):
    """Build the single fused collator-loss kernel.

    Static (trace-time) parameters:
      ce_eps / ce_weights : per-head label-smoothing epsilon / loss weight.
      bce_weight          : weight of the BCE 'inter' head.
      n_pairs             : number of (vis, lang) embedding pairs passed in.
      clip_loss_enabled   : if False, only the last pair's similarity is emitted.

    Ref order (all full-array blocks, single grid step):
      scale(SMEM (1,)), ce_logits[h](B,Ch), ce_labels[h](B,1) i32,
      inter_logits(B,1), inter_labels(B,1) i32,
      vis[p](B,D), lang[p](B,D)  ->  loss(SMEM (1,1)), sim(B,B).
    """
    n_ce = len(ce_eps)

    def kernel(*refs):
        i = 0
        scale_ref = refs[i]; i += 1
        ce_logit_refs = refs[i:i + n_ce]; i += n_ce
        ce_label_refs = refs[i:i + n_ce]; i += n_ce
        inter_logit_ref = refs[i]; i += 1
        inter_label_ref = refs[i]; i += 1
        vis_refs = refs[i:i + n_pairs]; i += n_pairs
        lang_refs = refs[i:i + n_pairs]; i += n_pairs
        loss_ref = refs[i]; i += 1
        sim_ref = refs[i]

        total = jnp.zeros((1, 1), jnp.float32)    # keep accumulation in vector form

        # ---- (label-smoothed) softmax cross-entropy heads, closed form ----
        for h in range(n_ce):
            x = ce_logit_refs[h][...].astype(jnp.float32)           # (B, C)
            lab = ce_label_refs[h][...]                              # (B, 1) int32
            c = x.shape[-1]
            m = jnp.max(x, axis=-1, keepdims=True)
            lse = jnp.log(jnp.sum(jnp.exp(x - m), axis=-1, keepdims=True)) + m
            col = jax.lax.broadcasted_iota(jnp.int32, x.shape, 1)
            x_lab = jnp.sum(jnp.where(col == lab, x, 0.0), axis=-1, keepdims=True)
            nll = lse - x_lab                                        # (B, 1)
            eps = ce_eps[h]
            if eps == 0.0:
                per_row = nll
            else:
                sum_x = jnp.sum(x, axis=-1, keepdims=True)
                per_row = (1.0 - eps) * nll + (eps / c) * (c * lse - sum_x)
            total = total + ce_weights[h] * jnp.mean(per_row, axis=0, keepdims=True)

        # ---- BCE-with-logits 'inter' head (exact, no 2-class padding) ----
        xb = inter_logit_ref[...].astype(jnp.float32)                # (B, 1)
        yb = inter_label_ref[...].astype(jnp.float32)                # (B, 1)
        bce = (jnp.maximum(xb, 0.0) - xb * yb
               + jnp.log(1.0 + jnp.exp(-jnp.abs(xb))))
        total = total + bce_weight * jnp.mean(bce, axis=0, keepdims=True)

        # ---- CLIP contrastive loss over all pairs (statically unrolled) ----
        if clip_loss_enabled:
            # logit_scale is a single learned scalar; exp on a (1,1) splat -> EUP.
            scale = jnp.exp(jnp.full((1, 1), scale_ref[0], jnp.float32))

        for p in range(n_pairs):
            v = vis_refs[p][...]
            lng = lang_refs[p][...]
            sim = jax.lax.dot_general(v, lng, (((1,), (1,)), ((), ())),
                                      preferred_element_type=jnp.float32)  # (B, B)
            if p == n_pairs - 1:
                sim_ref[...] = sim.astype(sim_ref.dtype)   # only sims[-1] is consumed
            if clip_loss_enabled:
                b = sim.shape[0]
                # TODO(synk): reference clip_loss impl unavailable; CLIP_LOSS_MARGIN
                # treated as 0 (standard symmetric InfoNCE).
                logits = scale * sim
                m_r = jnp.max(logits, axis=-1, keepdims=True)
                lse_r = jnp.log(jnp.sum(jnp.exp(logits - m_r),
                                        axis=-1, keepdims=True)) + m_r     # (B, 1)
                m_c = jnp.max(logits, axis=0, keepdims=True)
                lse_c = jnp.log(jnp.sum(jnp.exp(logits - m_c),
                                        axis=0, keepdims=True)) + m_c      # (1, B)
                # positive-pair term from the SAME MXU sim (consistent arithmetic)
                row = jax.lax.broadcasted_iota(jnp.int32, logits.shape, 0)
                cc = jax.lax.broadcasted_iota(jnp.int32, logits.shape, 1)
                diag_mean = jnp.sum(jnp.where(row == cc, logits, 0.0),
                                    keepdims=True) / b                     # (1, 1)
                total = total + (0.5 * (jnp.mean(lse_r, axis=0, keepdims=True)
                                        + jnp.mean(lse_c, axis=1, keepdims=True))
                                 - diag_mean)

        loss_ref[0, 0] = jnp.sum(total)

    return kernel


# ---------------------------------------------------------------------------
# Collator forward (all loss math in ONE single-step Pallas kernel)
# ---------------------------------------------------------------------------

class Cfg:
    FEATS_AGGR_WEIGHT = 7.0
    CLS_WEIGHT = 0.5
    CE_EPSILON = 0.1
    CLIP_LOSS = True
    CLIP_LOSS_MARGIN = 0.0
    NAME = "dual-text-add-trained"   # no 'view' branch, no pair dropping
    USE_METRIC_LOSS = False          # TODO(synk): build_metric_loss impl unavailable


def siamese_collator_forward(id_car, g_feats, outputs, cfg=Cfg):
    pairs = outputs["pairs"]
    logit_scale = outputs["logit_scale"]
    cls_logits = outputs["cls_logits"]
    (proj_type1, proj_motion1, proj_color1, proj_size1, _proj_car,
     proj_type2, proj_color2, _proj_mo, proj_inter) = outputs["vis_features"]
    type1, type2, motion1, color1, color2, size1, inter = g_feats

    b = proj_type1.shape[0]
    aggr_w = 1.0 / cfg.FEATS_AGGR_WEIGHT

    # CE-style heads: 6 attribute heads (eps=0) + N label-smoothed cls heads.
    ce_logits = [proj_type1, proj_type2, proj_motion1,
                 proj_color1, proj_color2, proj_size1] + list(cls_logits)
    ce_labels = [type1, type2, motion1, color1, color2, size1] \
        + [id_car] * len(cls_logits)
    ce_eps = tuple([0.0] * 6 + [cfg.CE_EPSILON] * len(cls_logits))
    ce_w = tuple([aggr_w] * 6 + [cfg.CLS_WEIGHT] * len(cls_logits))

    # model name / head flags keep all pairs ('dual-text-add-trained').
    loss_pairs = pairs if cfg.CLIP_LOSS else pairs[-1:]
    n_pairs = len(loss_pairs)
    vis = [pr[0] for pr in loss_pairs]
    lang = [pr[1] for pr in loss_pairs]

    # (B,) -> (B,1) label reshapes are layout-only; no pad/stack/concat on host.
    ce_labels_2d = [jnp.asarray(l, jnp.int32).reshape(b, 1) for l in ce_labels]
    inter_2d = jnp.asarray(inter, jnp.int32).reshape(b, 1)
    # TODO(synk): logit_scale is a single learned scalar here; a >1-element
    # logit_scale would need an in-kernel mean instead of taking element 0.
    log_scale = jnp.reshape(logit_scale, (-1,))[:1].astype(jnp.float32)

    kernel = _make_fused_kernel(ce_eps, ce_w, aggr_w, n_pairs, cfg.CLIP_LOSS)
    n_vmem = len(ce_logits) + len(ce_labels_2d) + 2 + 2 * n_pairs

    loss2d, acc_sim = pl.pallas_call(
        kernel,
        out_shape=(jax.ShapeDtypeStruct((1, 1), jnp.float32),
                   jax.ShapeDtypeStruct((b, b), jnp.float32)),
        in_specs=[_SMEM] + [_VMEM] * n_vmem,
        out_specs=(_SMEM, _VMEM),
    )(log_scale, *ce_logits, *ce_labels_2d, proj_inter, inter_2d, *vis, *lang)

    # TODO(synk): 'view' branch, metric loss (cfg.MODEL.METRIC), AverageMeter /
    # wandb logging are not reproducible here and are omitted.
    return loss2d[0, 0], acc_sim


# ---------------------------------------------------------------------------
# Pure-JAX reference (sanity check)
# ---------------------------------------------------------------------------

def _ref_ce(logits, labels):
    logp = jax.nn.log_softmax(logits.astype(jnp.float32), axis=-1)
    return -jnp.mean(jnp.take_along_axis(logp, labels[:, None], axis=-1))


def _ref_smoothed_ce(logits, labels, eps):
    c = logits.shape[-1]
    logp = jax.nn.log_softmax(logits.astype(jnp.float32), axis=-1)
    nll = -jnp.take_along_axis(logp, labels[:, None], axis=-1)[:, 0]
    return jnp.mean((1.0 - eps) * nll - (eps / c) * jnp.sum(logp, axis=-1))


def _ref_bce(x, y):
    x = x.astype(jnp.float32)
    y = y.astype(jnp.float32)
    return jnp.mean(jnp.maximum(x, 0.0) - x * y + jnp.log1p(jnp.exp(-jnp.abs(x))))


def _ref_clip(v, l, scale):
    sim = jnp.einsum("bd,cd->bc", v.astype(jnp.float32), l.astype(jnp.float32),
                     precision="highest")
    logits = scale * sim
    idx = jnp.arange(v.shape[0])
    lp_r = jax.nn.log_softmax(logits, axis=-1)
    lp_c = jax.nn.log_softmax(logits, axis=0)
    return 0.5 * (-jnp.mean(lp_r[idx, idx]) - jnp.mean(lp_c[idx, idx])), sim


def reference_forward(id_car, g_feats, outputs, cfg=Cfg):
    pairs = outputs["pairs"]
    cls_logits = outputs["cls_logits"]
    (pt1, pm1, pc1, ps1, _pcar, pt2, pc2, _pmo, pint) = outputs["vis_features"]
    t1, t2, m1, c1, c2, s1, inter = g_feats
    aggr = (_ref_ce(pt1, t1) + _ref_ce(pt2, t2) + _ref_ce(pm1, m1) +
            _ref_ce(pc1, c1) + _ref_ce(pc2, c2) + _ref_ce(ps1, s1) +
            _ref_bce(pint[:, 0], inter)) / cfg.FEATS_AGGR_WEIGHT
    cls_l = sum(cfg.CLS_WEIGHT * _ref_smoothed_ce(cl, id_car, cfg.CE_EPSILON)
                for cl in cls_logits)
    scale = jnp.exp(jnp.mean(outputs["logit_scale"]))
    clip_l = jnp.float32(0.0)
    sim = None
    for v, l in pairs:
        cl, sim = _ref_clip(v, l, scale)
        clip_l = clip_l + cl
    return clip_l + cls_l + aggr, sim


# ---------------------------------------------------------------------------
# Main
# ---------------------------------------------------------------------------

if __name__ == "__main__":
    B, D = 8, 32                 # batch, embedding dim
    N_TYPE, N_MOTION, N_COLOR, N_SIZE = 8, 4, 8, 4
    NUM_IDS = 16
    N_PAIRS, N_CLS_HEADS = 3, 2

    key = jax.random.PRNGKey(0)
    keys = jax.random.split(key, 24)

    def normed(k, shape):
        x = jax.random.normal(k, shape, dtype=jnp.float32)
        return x / jnp.linalg.norm(x, axis=-1, keepdims=True)

    # synthesized encoder outputs
    vis_features = (
        jax.random.normal(keys[0], (B, N_TYPE), jnp.float32),    # proj_type1
        jax.random.normal(keys[1], (B, N_MOTION), jnp.float32),  # proj_motion1
        jax.random.normal(keys[2], (B, N_COLOR), jnp.float32),   # proj_color1
        jax.random.normal(keys[3], (B, N_SIZE), jnp.float32),    # proj_size1
        jax.random.normal(keys[4], (B, D), jnp.float32),         # proj_car   (unused in loss)
        jax.random.normal(keys[5], (B, N_TYPE), jnp.float32),    # proj_type2
        jax.random.normal(keys[6], (B, N_COLOR), jnp.float32),   # proj_color2
        jax.random.normal(keys[7], (B, D), jnp.float32),         # proj_mo    (unused in loss)
        jax.random.normal(keys[8], (B, 1), jnp.float32),         # proj_inter
    )
    pairs = [(normed(keys[9 + 2 * i], (B, D)), normed(keys[10 + 2 * i], (B, D)))
             for i in range(N_PAIRS)]
    cls_logits = [jax.random.normal(keys[15 + i], (B, NUM_IDS), jnp.float32)
                  for i in range(N_CLS_HEADS)]
    logit_scale = jnp.full((1,), 2.0, dtype=jnp.float32)

    outputs = {"pairs": pairs, "logit_scale": logit_scale,
               "cls_logits": cls_logits, "vis_features": vis_features}

    # ground-truth attribute labels (g_feats) and car ids
    g_feats = (
        jax.random.randint(keys[17], (B,), 0, N_TYPE),    # type1
        jax.random.randint(keys[18], (B,), 0, N_TYPE),    # type2
        jax.random.randint(keys[19], (B,), 0, N_MOTION),  # motion1
        jax.random.randint(keys[20], (B,), 0, N_COLOR),   # color1
        jax.random.randint(keys[21], (B,), 0, N_COLOR),   # color2
        jax.random.randint(keys[22], (B,), 0, N_SIZE),    # size1
        jax.random.bernoulli(keys[23], 0.5, (B,)).astype(jnp.int32),  # inter
    )
    id_car = jax.random.randint(keys[16], (B,), 0, NUM_IDS)

    fwd = jax.jit(lambda idc, gf, out: siamese_collator_forward(idc, gf, out))
    loss, acc_sim = fwd(id_car, g_feats, outputs)
    jax.block_until_ready((loss, acc_sim))

    assert loss.shape == () and acc_sim.shape == (B, B)
    assert bool(jnp.isfinite(loss))

    ref_loss, ref_sim = reference_forward(id_car, g_feats, outputs)
    assert bool(jnp.allclose(loss, ref_loss, rtol=5e-2, atol=5e-2))
    assert bool(jnp.allclose(acc_sim, ref_sim, rtol=5e-2, atol=5e-2))

    print("KERNEL_OK")
</pallas_src>

<mosaic_0001>
module attributes {stable_mosaic.version = 11 : i64} {
  func.func @kernel(%arg0: memref<1xf32, #tpu.memory_space<smem>>, %arg1: memref<8x8xf32, #tpu.memory_space<vmem>>, %arg2: memref<8x8xf32, #tpu.memory_space<vmem>>, %arg3: memref<8x4xf32, #tpu.memory_space<vmem>>, %arg4: memref<8x8xf32, #tpu.memory_space<vmem>>, %arg5: memref<8x8xf32, #tpu.memory_space<vmem>>, %arg6: memref<8x4xf32, #tpu.memory_space<vmem>>, %arg7: memref<8x16xf32, #tpu.memory_space<vmem>>, %arg8: memref<8x16xf32, #tpu.memory_space<vmem>>, %arg9: memref<8x1xi32, #tpu.memory_space<vmem>>, %arg10: memref<8x1xi32, #tpu.memory_space<vmem>>, %arg11: memref<8x1xi32, #tpu.memory_space<vmem>>, %arg12: memref<8x1xi32, #tpu.memory_space<vmem>>, %arg13: memref<8x1xi32, #tpu.memory_space<vmem>>, %arg14: memref<8x1xi32, #tpu.memory_space<vmem>>, %arg15: memref<8x1xi32, #tpu.memory_space<vmem>>, %arg16: memref<8x1xi32, #tpu.memory_space<vmem>>, %arg17: memref<8x1xf32, #tpu.memory_space<vmem>>, %arg18: memref<8x1xi32, #tpu.memory_space<vmem>>, %arg19: memref<8x32xf32, #tpu.memory_space<vmem>>, %arg20: memref<8x32xf32, #tpu.memory_space<vmem>>, %arg21: memref<8x32xf32, #tpu.memory_space<vmem>>, %arg22: memref<8x32xf32, #tpu.memory_space<vmem>>, %arg23: memref<8x32xf32, #tpu.memory_space<vmem>>, %arg24: memref<8x32xf32, #tpu.memory_space<vmem>>, %arg25: memref<1x1xf32, #tpu.memory_space<smem>>, %arg26: memref<8x8xf32, #tpu.memory_space<vmem>>) attributes {dimension_semantics = [], scalar_prefetch = 0 : i64, scratch_operands = 0 : i64, tpu.core_type = #tpu.core_type<tc>} {
    %cst = arith.constant 0.000000e+00 : f32
    %0 = vector.broadcast %cst : f32 to vector<1x1xf32>
    %c0 = arith.constant 0 : index
    %c0_0 = arith.constant 0 : index
    %1 = vector.load %arg1[%c0, %c0_0] : memref<8x8xf32, #tpu.memory_space<vmem>>, vector<8x8xf32>
    %c0_1 = arith.constant 0 : index
    %c0_2 = arith.constant 0 : index
    %2 = vector.load %arg9[%c0_1, %c0_2] : memref<8x1xi32, #tpu.memory_space<vmem>>, vector<8x1xi32>
    %cst_3 = arith.constant dense<0xFF800000> : vector<8xf32>
    %3 = vector.multi_reduction <maximumf>, %1, %cst_3 [1] : vector<8x8xf32> to vector<8xf32>
    %4 = vector.shape_cast %3 : vector<8xf32> to vector<8x1xf32>
    %5 = vector.broadcast %4 : vector<8x1xf32> to vector<8x8xf32>
    %6 = arith.subf %1, %5 : vector<8x8xf32>
    %7 = math.exp %6 : vector<8x8xf32>
    %cst_4 = arith.constant dense<0.000000e+00> : vector<8xf32>
    %8 = vector.multi_reduction <add>, %7, %cst_4 [1] : vector<8x8xf32> to vector<8xf32>
    %9 = vector.shape_cast %8 : vector<8xf32> to vector<8x1xf32>
    %10 = math.log %9 : vector<8x1xf32>
    %11 = arith.addf %10, %4 : vector<8x1xf32>
    %12 = tpu.iota {dimensions = array<i32: 1>} : vector<8x8xi32>
    %13 = vector.broadcast %2 : vector<8x1xi32> to vector<8x8xi32>
    %14 = arith.cmpi eq, %12, %13 : vector<8x8xi32>
    %cst_5 = arith.constant 0.000000e+00 : f32
    %15 = vector.broadcast %cst_5 : f32 to vector<8x8xf32>
    %16 = arith.select %14, %1, %15 : vector<8x8xi1>, vector<8x8xf32>
    %cst_6 = arith.constant dense<0.000000e+00> : vector<8xf32>
    %17 = vector.multi_reduction <add>, %16, %cst_6 [1] : vector<8x8xf32> to vector<8xf32>
    %18 = vector.shape_cast %17 : vector<8xf32> to vector<8x1xf32>
    %19 = arith.subf %11, %18 : vector<8x1xf32>
    %cst_7 = arith.constant dense<0.000000e+00> : vector<1xf32>
    %20 = vector.multi_reduction <add>, %19, %cst_7 [0] : vector<8x1xf32> to vector<1xf32>
    %21 = vector.shape_cast %20 : vector<1xf32> to vector<1x1xf32>
    %cst_8 = arith.constant 8.000000e+00 : f32
    %22 = vector.broadcast %cst_8 : f32 to vector<1x1xf32>
    %23 = arith.divf %21, %22 : vector<1x1xf32>
    %cst_9 = arith.constant 0.142857149 : f32
    %24 = vector.broadcast %cst_9 : f32 to vector<1x1xf32>
    %25 = arith.mulf %24, %23 : vector<1x1xf32>
    %26 = arith.addf %0, %25 : vector<1x1xf32>
    %c0_10 = arith.constant 0 : index
    %c0_11 = arith.constant 0 : index
    %27 = vector.load %arg2[%c0_10, %c0_11] : memref<8x8xf32, #tpu.memory_space<vmem>>, vector<8x8xf32>
    %c0_12 = arith.constant 0 : index
    %c0_13 = arith.constant 0 : index
    %28 = vector.load %arg10[%c0_12, %c0_13] : memref<8x1xi32, #tpu.memory_space<vmem>>, vector<8x1xi32>
    %cst_14 = arith.constant dense<0xFF800000> : vector<8xf32>
    %29 = vector.multi_reduction <maximumf>, %27, %cst_14 [1] : vector<8x8xf32> to vector<8xf32>
    %30 = vector.shape_cast %29 : vector<8xf32> to vector<8x1xf32>
    %31 = vector.broadcast %30 : vector<8x1xf32> to vector<8x8xf32>
    %32 = arith.subf %27, %31 : vector<8x8xf32>
    %33 = math.exp %32 : vector<8x8xf32>
    %cst_15 = arith.constant dense<0.000000e+00> : vector<8xf32>
    %34 = vector.multi_reduction <add>, %33, %cst_15 [1] : vector<8x8xf32> to vector<8xf32>
    %35 = vector.shape_cast %34 : vector<8xf32> to vector<8x1xf32>
    %36 = math.log %35 : vector<8x1xf32>
    %37 = arith.addf %36, %30 : vector<8x1xf32>
    %38 = tpu.iota {dimensions = array<i32: 1>} : vector<8x8xi32>
    %39 = vector.broadcast %28 : vector<8x1xi32> to vector<8x8xi32>
    %40 = arith.cmpi eq, %38, %39 : vector<8x8xi32>
    %cst_16 = arith.constant 0.000000e+00 : f32
    %41 = vector.broadcast %cst_16 : f32 to vector<8x8xf32>
    %42 = arith.select %40, %27, %41 : vector<8x8xi1>, vector<8x8xf32>
    %cst_17 = arith.constant dense<0.000000e+00> : vector<8xf32>
    %43 = vector.multi_reduction <add>, %42, %cst_17 [1] : vector<8x8xf32> to vector<8xf32>
    %44 = vector.shape_cast %43 : vector<8xf32> to vector<8x1xf32>
    %45 = arith.subf %37, %44 : vector<8x1xf32>
    %cst_18 = arith.constant dense<0.000000e+00> : vector<1xf32>
    %46 = vector.multi_reduction <add>, %45, %cst_18 [0] : vector<8x1xf32> to vector<1xf32>
    %47 = vector.shape_cast %46 : vector<1xf32> to vector<1x1xf32>
    %cst_19 = arith.constant 8.000000e+00 : f32
    %48 = vector.broadcast %cst_19 : f32 to vector<1x1xf32>
    %49 = arith.divf %47, %48 : vector<1x1xf32>
    %cst_20 = arith.constant 0.142857149 : f32
    %50 = vector.broadcast %cst_20 : f32 to vector<1x1xf32>
    %51 = arith.mulf %50, %49 : vector<1x1xf32>
    %52 = arith.addf %26, %51 : vector<1x1xf32>
    %c0_21 = arith.constant 0 : index
    %c0_22 = arith.constant 0 : index
    %53 = vector.load %arg3[%c0_21, %c0_22] : memref<8x4xf32, #tpu.memory_space<vmem>>, vector<8x4xf32>
    %c0_23 = arith.constant 0 : index
    %c0_24 = arith.constant 0 : index
    %54 = vector.load %arg11[%c0_23, %c0_24] : memref<8x1xi32, #tpu.memory_space<vmem>>, vector<8x1xi32>
    %cst_25 = arith.constant dense<0xFF800000> : vector<8xf32>
    %55 = vector.multi_reduction <maximumf>, %53, %cst_25 [1] : vector<8x4xf32> to vector<8xf32>
    %56 = vector.shape_cast %55 : vector<8xf32> to vector<8x1xf32>
    %57 = vector.broadcast %56 : vector<8x1xf32> to vector<8x4xf32>
    %58 = arith.subf %53, %57 : vector<8x4xf32>
    %59 = math.exp %58 : vector<8x4xf32>
    %cst_26 = arith.constant dense<0.000000e+00> : vector<8xf32>
    %60 = vector.multi_reduction <add>, %59, %cst_26 [1] : vector<8x4xf32> to vector<8xf32>
    %61 = vector.shape_cast %60 : vector<8xf32> to vector<8x1xf32>
    %62 = math.log %61 : vector<8x1xf32>
    %63 = arith.addf %62, %56 : vector<8x1xf32>
    %64 = tpu.iota {dimensions = array<i32: 1>} : vector<8x4xi32>
    %65 = vector.broadcast %54 : vector<8x1xi32> to vector<8x4xi32>
    %66 = arith.cmpi eq, %64, %65 : vector<8x4xi32>
    %cst_27 = arith.constant 0.000000e+00 : f32
    %67 = vector.broadcast %cst_27 : f32 to vector<8x4xf32>
    %68 = arith.select %66, %53, %67 : vector<8x4xi1>, vector<8x4xf32>
    %cst_28 = arith.constant dense<0.000000e+00> : vector<8xf32>
    %69 = vector.multi_reduction <add>, %68, %cst_28 [1] : vector<8x4xf32> to vector<8xf32>
    %70 = vector.shape_cast %69 : vector<8xf32> to vector<8x1xf32>
    %71 = arith.subf %63, %70 : vector<8x1xf32>
    %cst_29 = arith.constant dense<0.000000e+00> : vector<1xf32>
    %72 = vector.multi_reduction <add>, %71, %cst_29 [0] : vector<8x1xf32> to vector<1xf32>
    %73 = vector.shape_cast %72 : vector<1xf32> to vector<1x1xf32>
    %cst_30 = arith.constant 8.000000e+00 : f32
    %74 = vector.broadcast %cst_30 : f32 to vector<1x1xf32>
    %75 = arith.divf %73, %74 : vector<1x1xf32>
    %cst_31 = arith.constant 0.142857149 : f32
    %76 = vector.broadcast %cst_31 : f32 to vector<1x1xf32>
    %77 = arith.mulf %76, %75 : vector<1x1xf32>
    %78 = arith.addf %52, %77 : vector<1x1xf32>
    %c0_32 = arith.constant 0 : index
    %c0_33 = arith.constant 0 : index
    %79 = vector.load %arg4[%c0_32, %c0_33] : memref<8x8xf32, #tpu.memory_space<vmem>>, vector<8x8xf32>
    %c0_34 = arith.constant 0 : index
    %c0_35 = arith.constant 0 : index
    %80 = vector.load %arg12[%c0_34, %c0_35] : memref<8x1xi32, #tpu.memory_space<vmem>>, vector<8x1xi32>
    %cst_36 = arith.constant dense<0xFF800000> : vector<8xf32>
    %81 = vector.multi_reduction <maximumf>, %79, %cst_36 [1] : vector<8x8xf32> to vector<8xf32>
    %82 = vector.shape_cast %81 : vector<8xf32> to vector<8x1xf32>
    %83 = vector.broadcast %82 : vector<8x1xf32> to vector<8x8xf32>
    %84 = arith.subf %79, %83 : vector<8x8xf32>
    %85 = math.exp %84 : vector<8x8xf32>
    %cst_37 = arith.constant dense<0.000000e+00> : vector<8xf32>
    %86 = vector.multi_reduction <add>, %85, %cst_37 [1] : vector<8x8xf32> to vector<8xf32>
    %87 = vector.shape_cast %86 : vector<8xf32> to vector<8x1xf32>
    %88 = math.log %87 : vector<8x1xf32>
    %89 = arith.addf %88, %82 : vector<8x1xf32>
    %90 = tpu.iota {dimensions = array<i32: 1>} : vector<8x8xi32>
    %91 = vector.broadcast %80 : vector<8x1xi32> to vector<8x8xi32>
    %92 = arith.cmpi eq, %90, %91 : vector<8x8xi32>
    %cst_38 = arith.constant 0.000000e+00 : f32
    %93 = vector.broadcast %cst_38 : f32 to vector<8x8xf32>
    %94 = arith.select %92, %79, %93 : vector<8x8xi1>, vector<8x8xf32>
    %cst_39 = arith.constant dense<0.000000e+00> : vector<8xf32>
    %95 = vector.multi_reduction <add>, %94, %cst_39 [1] : vector<8x8xf32> to vector<8xf32>
    %96 = vector.shape_cast %95 : vector<8xf32> to vector<8x1xf32>
    %97 = arith.subf %89, %96 : vector<8x1xf32>
    %cst_40 = arith.constant dense<0.000000e+00> : vector<1xf32>
    %98 = vector.multi_reduction <add>, %97, %cst_40 [0] : vector<8x1xf32> to vector<1xf32>
    %99 = vector.shape_cast %98 : vector<1xf32> to vector<1x1xf32>
    %cst_41 = arith.constant 8.000000e+00 : f32
    %100 = vector.broadcast %cst_41 : f32 to vector<1x1xf32>
    %101 = arith.divf %99, %100 : vector<1x1xf32>
    %cst_42 = arith.constant 0.142857149 : f32
    %102 = vector.broadcast %cst_42 : f32 to vector<1x1xf32>
    %103 = arith.mulf %102, %101 : vector<1x1xf32>
    %104 = arith.addf %78, %103 : vector<1x1xf32>
    %c0_43 = arith.constant 0 : index
    %c0_44 = arith.constant 0 : index
    %105 = vector.load %arg5[%c0_43, %c0_44] : memref<8x8xf32, #tpu.memory_space<vmem>>, vector<8x8xf32>
    %c0_45 = arith.constant 0 : index
    %c0_46 = arith.constant 0 : index
    %106 = vector.load %arg13[%c0_45, %c0_46] : memref<8x1xi32, #tpu.memory_space<vmem>>, vector<8x1xi32>
    %cst_47 = arith.constant dense<0xFF800000> : vector<8xf32>
    %107 = vector.multi_reduction <maximumf>, %105, %cst_47 [1] : vector<8x8xf32> to vector<8xf32>
    %108 = vector.shape_cast %107 : vector<8xf32> to vector<8x1xf32>
    %109 = vector.broadcast %108 : vector<8x1xf32> to vector<8x8xf32>
    %110 = arith.subf %105, %109 : vector<8x8xf32>
    %111 = math.exp %110 : vector<8x8xf32>
    %cst_48 = arith.constant dense<0.000000e+00> : vector<8xf32>
    %112 = vector.multi_reduction <add>, %111, %cst_48 [1] : vector<8x8xf32> to vector<8xf32>
    %113 = vector.shape_cast %112 : vector<8xf32> to vector<8x1xf32>
    %114 = math.log %113 : vector<8x1xf32>
    %115 = arith.addf %114, %108 : vector<8x1xf32>
    %116 = tpu.iota {dimensions = array<i32: 1>} : vector<8x8xi32>
    %117 = vector.broadcast %106 : vector<8x1xi32> to vector<8x8xi32>
    %118 = arith.cmpi eq, %116, %117 : vector<8x8xi32>
    %cst_49 = arith.constant 0.000000e+00 : f32
    %119 = vector.broadcast %cst_49 : f32 to vector<8x8xf32>
    %120 = arith.select %118, %105, %119 : vector<8x8xi1>, vector<8x8xf32>
    %cst_50 = arith.constant dense<0.000000e+00> : vector<8xf32>
    %121 = vector.multi_reduction <add>, %120, %cst_50 [1] : vector<8x8xf32> to vector<8xf32>
    %122 = vector.shape_cast %121 : vector<8xf32> to vector<8x1xf32>
    %123 = arith.subf %115, %122 : vector<8x1xf32>
    %cst_51 = arith.constant dense<0.000000e+00> : vector<1xf32>
    %124 = vector.multi_reduction <add>, %123, %cst_51 [0] : vector<8x1xf32> to vector<1xf32>
    %125 = vector.shape_cast %124 : vector<1xf32> to vector<1x1xf32>
    %cst_52 = arith.constant 8.000000e+00 : f32
    %126 = vector.broadcast %cst_52 : f32 to vector<1x1xf32>
    %127 = arith.divf %125, %126 : vector<1x1xf32>
    %cst_53 = arith.constant 0.142857149 : f32
    %128 = vector.broadcast %cst_53 : f32 to vector<1x1xf32>
    %129 = arith.mulf %128, %127 : vector<1x1xf32>
    %130 = arith.addf %104, %129 : vector<1x1xf32>
    %c0_54 = arith.constant 0 : index
    %c0_55 = arith.constant 0 : index
    %131 = vector.load %arg6[%c0_54, %c0_55] : memref<8x4xf32, #tpu.memory_space<vmem>>, vector<8x4xf32>
    %c0_56 = arith.constant 0 : index
    %c0_57 = arith.constant 0 : index
    %132 = vector.load %arg14[%c0_56, %c0_57] : memref<8x1xi32, #tpu.memory_space<vmem>>, vector<8x1xi32>
    %cst_58 = arith.constant dense<0xFF800000> : vector<8xf32>
    %133 = vector.multi_reduction <maximumf>, %131, %cst_58 [1] : vector<8x4xf32> to vector<8xf32>
    %134 = vector.shape_cast %133 : vector<8xf32> to vector<8x1xf32>
    %135 = vector.broadcast %134 : vector<8x1xf32> to vector<8x4xf32>
    %136 = arith.subf %131, %135 : vector<8x4xf32>
    %137 = math.exp %136 : vector<8x4xf32>
    %cst_59 = arith.constant dense<0.000000e+00> : vector<8xf32>
    %138 = vector.multi_reduction <add>, %137, %cst_59 [1] : vector<8x4xf32> to vector<8xf32>
    %139 = vector.shape_cast %138 : vector<8xf32> to vector<8x1xf32>
    %140 = math.log %139 : vector<8x1xf32>
    %141 = arith.addf %140, %134 : vector<8x1xf32>
    %142 = tpu.iota {dimensions = array<i32: 1>} : vector<8x4xi32>
    %143 = vector.broadcast %132 : vector<8x1xi32> to vector<8x4xi32>
    %144 = arith.cmpi eq, %142, %143 : vector<8x4xi32>
    %cst_60 = arith.constant 0.000000e+00 : f32
    %145 = vector.broadcast %cst_60 : f32 to vector<8x4xf32>
    %146 = arith.select %144, %131, %145 : vector<8x4xi1>, vector<8x4xf32>
    %cst_61 = arith.constant dense<0.000000e+00> : vector<8xf32>
    %147 = vector.multi_reduction <add>, %146, %cst_61 [1] : vector<8x4xf32> to vector<8xf32>
    %148 = vector.shape_cast %147 : vector<8xf32> to vector<8x1xf32>
    %149 = arith.subf %141, %148 : vector<8x1xf32>
    %cst_62 = arith.constant dense<0.000000e+00> : vector<1xf32>
    %150 = vector.multi_reduction <add>, %149, %cst_62 [0] : vector<8x1xf32> to vector<1xf32>
    %151 = vector.shape_cast %150 : vector<1xf32> to vector<1x1xf32>
    %cst_63 = arith.constant 8.000000e+00 : f32
    %152 = vector.broadcast %cst_63 : f32 to vector<1x1xf32>
    %153 = arith.divf %151, %152 : vector<1x1xf32>
    %cst_64 = arith.constant 0.142857149 : f32
    %154 = vector.broadcast %cst_64 : f32 to vector<1x1xf32>
    %155 = arith.mulf %154, %153 : vector<1x1xf32>
    %156 = arith.addf %130, %155 : vector<1x1xf32>
    %c0_65 = arith.constant 0 : index
    %c0_66 = arith.constant 0 : index
    %157 = vector.load %arg7[%c0_65, %c0_66] : memref<8x16xf32, #tpu.memory_space<vmem>>, vector<8x16xf32>
    %c0_67 = arith.constant 0 : index
    %c0_68 = arith.constant 0 : index
    %158 = vector.load %arg15[%c0_67, %c0_68] : memref<8x1xi32, #tpu.memory_space<vmem>>, vector<8x1xi32>
    %cst_69 = arith.constant dense<0xFF800000> : vector<8xf32>
    %159 = vector.multi_reduction <maximumf>, %157, %cst_69 [1] : vector<8x16xf32> to vector<8xf32>
    %160 = vector.shape_cast %159 : vector<8xf32> to vector<8x1xf32>
    %161 = vector.broadcast %160 : vector<8x1xf32> to vector<8x16xf32>
    %162 = arith.subf %157, %161 : vector<8x16xf32>
    %163 = math.exp %162 : vector<8x16xf32>
    %cst_70 = arith.constant dense<0.000000e+00> : vector<8xf32>
    %164 = vector.multi_reduction <add>, %163, %cst_70 [1] : vector<8x16xf32> to vector<8xf32>
    %165 = vector.shape_cast %164 : vector<8xf32> to vector<8x1xf32>
    %166 = math.log %165 : vector<8x1xf32>
    %167 = arith.addf %166, %160 : vector<8x1xf32>
    %168 = tpu.iota {dimensions = array<i32: 1>} : vector<8x16xi32>
    %169 = vector.broadcast %158 : vector<8x1xi32> to vector<8x16xi32>
    %170 = arith.cmpi eq, %168, %169 : vector<8x16xi32>
    %cst_71 = arith.constant 0.000000e+00 : f32
    %171 = vector.broadcast %cst_71 : f32 to vector<8x16xf32>
    %172 = arith.select %170, %157, %171 : vector<8x16xi1>, vector<8x16xf32>
    %cst_72 = arith.constant dense<0.000000e+00> : vector<8xf32>
    %173 = vector.multi_reduction <add>, %172, %cst_72 [1] : vector<8x16xf32> to vector<8xf32>
    %174 = vector.shape_cast %173 : vector<8xf32> to vector<8x1xf32>
    %175 = arith.subf %167, %174 : vector<8x1xf32>
    %cst_73 = arith.constant dense<0.000000e+00> : vector<8xf32>
    %176 = vector.multi_reduction <add>, %157, %cst_73 [1] : vector<8x16xf32> to vector<8xf32>
    %177 = vector.shape_cast %176 : vector<8xf32> to vector<8x1xf32>
    %cst_74 = arith.constant 0.899999976 : f32
    %178 = vector.broadcast %cst_74 : f32 to vector<8x1xf32>
    %179 = arith.mulf %178, %175 : vector<8x1xf32>
    %cst_75 = arith.constant 1.600000e+01 : f32
    %180 = vector.broadcast %cst_75 : f32 to vector<8x1xf32>
    %181 = arith.mulf %180, %167 : vector<8x1xf32>
    %182 = arith.subf %181, %177 : vector<8x1xf32>
    %cst_76 = arith.constant 6.250000e-03 : f32
    %183 = vector.broadcast %cst_76 : f32 to vector<8x1xf32>
    %184 = arith.mulf %183, %182 : vector<8x1xf32>
    %185 = arith.addf %179, %184 : vector<8x1xf32>
    %cst_77 = arith.constant dense<0.000000e+00> : vector<1xf32>
    %186 = vector.multi_reduction <add>, %185, %cst_77 [0] : vector<8x1xf32> to vector<1xf32>
    %187 = vector.shape_cast %186 : vector<1xf32> to vector<1x1xf32>
    %cst_78 = arith.constant 8.000000e+00 : f32
    %188 = vector.broadcast %cst_78 : f32 to vector<1x1xf32>
    %189 = arith.divf %187, %188 : vector<1x1xf32>
    %cst_79 = arith.constant 5.000000e-01 : f32
    %190 = vector.broadcast %cst_79 : f32 to vector<1x1xf32>
    %191 = arith.mulf %190, %189 : vector<1x1xf32>
    %192 = arith.addf %156, %191 : vector<1x1xf32>
    %c0_80 = arith.constant 0 : index
    %c0_81 = arith.constant 0 : index
    %193 = vector.load %arg8[%c0_80, %c0_81] : memref<8x16xf32, #tpu.memory_space<vmem>>, vector<8x16xf32>
    %c0_82 = arith.constant 0 : index
    %c0_83 = arith.constant 0 : index
    %194 = vector.load %arg16[%c0_82, %c0_83] : memref<8x1xi32, #tpu.memory_space<vmem>>, vector<8x1xi32>
    %cst_84 = arith.constant dense<0xFF800000> : vector<8xf32>
    %195 = vector.multi_reduction <maximumf>, %193, %cst_84 [1] : vector<8x16xf32> to vector<8xf32>
    %196 = vector.shape_cast %195 : vector<8xf32> to vector<8x1xf32>
    %197 = vector.broadcast %196 : vector<8x1xf32> to vector<8x16xf32>
    %198 = arith.subf %193, %197 : vector<8x16xf32>
    %199 = math.exp %198 : vector<8x16xf32>
    %cst_85 = arith.constant dense<0.000000e+00> : vector<8xf32>
    %200 = vector.multi_reduction <add>, %199, %cst_85 [1] : vector<8x16xf32> to vector<8xf32>
    %201 = vector.shape_cast %200 : vector<8xf32> to vector<8x1xf32>
    %202 = math.log %201 : vector<8x1xf32>
    %203 = arith.addf %202, %196 : vector<8x1xf32>
    %204 = tpu.iota {dimensions = array<i32: 1>} : vector<8x16xi32>
    %205 = vector.broadcast %194 : vector<8x1xi32> to vector<8x16xi32>
    %206 = arith.cmpi eq, %204, %205 : vector<8x16xi32>
    %cst_86 = arith.constant 0.000000e+00 : f32
    %207 = vector.broadcast %cst_86 : f32 to vector<8x16xf32>
    %208 = arith.select %206, %193, %207 : vector<8x16xi1>, vector<8x16xf32>
    %cst_87 = arith.constant dense<0.000000e+00> : vector<8xf32>
    %209 = vector.multi_reduction <add>, %208, %cst_87 [1] : vector<8x16xf32> to vector<8xf32>
    %210 = vector.shape_cast %209 : vector<8xf32> to vector<8x1xf32>
    %211 = arith.subf %203, %210 : vector<8x1xf32>
    %cst_88 = arith.constant dense<0.000000e+00> : vector<8xf32>
    %212 = vector.multi_reduction <add>, %193, %cst_88 [1] : vector<8x16xf32> to vector<8xf32>
    %213 = vector.shape_cast %212 : vector<8xf32> to vector<8x1xf32>
    %cst_89 = arith.constant 0.899999976 : f32
    %214 = vector.broadcast %cst_89 : f32 to vector<8x1xf32>
    %215 = arith.mulf %214, %211 : vector<8x1xf32>
    %cst_90 = arith.constant 1.600000e+01 : f32
    %216 = vector.broadcast %cst_90 : f32 to vector<8x1xf32>
    %217 = arith.mulf %216, %203 : vector<8x1xf32>
    %218 = arith.subf %217, %213 : vector<8x1xf32>
    %cst_91 = arith.constant 6.250000e-03 : f32
    %219 = vector.broadcast %cst_91 : f32 to vector<8x1xf32>
    %220 = arith.mulf %219, %218 : vector<8x1xf32>
    %221 = arith.addf %215, %220 : vector<8x1xf32>
    %cst_92 = arith.constant dense<0.000000e+00> : vector<1xf32>
    %222 = vector.multi_reduction <add>, %221, %cst_92 [0] : vector<8x1xf32> to vector<1xf32>
    %223 = vector.shape_cast %222 : vector<1xf32> to vector<1x1xf32>
    %cst_93 = arith.constant 8.000000e+00 : f32
    %224 = vector.broadcast %cst_93 : f32 to vector<1x1xf32>
    %225 = arith.divf %223, %224 : vector<1x1xf32>
    %cst_94 = arith.constant 5.000000e-01 : f32
    %226 = vector.broadcast %cst_94 : f32 to vector<1x1xf32>
    %227 = arith.mulf %226, %225 : vector<1x1xf32>
    %228 = arith.addf %192, %227 : vector<1x1xf32>
    %c0_95 = arith.constant 0 : index
    %c0_96 = arith.constant 0 : index
    %229 = vector.load %arg17[%c0_95, %c0_96] : memref<8x1xf32, #tpu.memory_space<vmem>>, vector<8x1xf32>
    %c0_97 = arith.constant 0 : index
    %c0_98 = arith.constant 0 : index
    %230 = vector.load %arg18[%c0_97, %c0_98] : memref<8x1xi32, #tpu.memory_space<vmem>>, vector<8x1xi32>
    %231 = arith.sitofp %230 : vector<8x1xi32> to vector<8x1xf32>
    %cst_99 = arith.constant 0.000000e+00 : f32
    %232 = vector.broadcast %cst_99 : f32 to vector<8x1xf32>
    %233 = arith.maximumf %229, %232 : vector<8x1xf32>
    %234 = arith.mulf %229, %231 : vector<8x1xf32>
    %235 = arith.subf %233, %234 : vector<8x1xf32>
    %236 = math.absf %229 : vector<8x1xf32>
    %cst_100 = arith.constant 0.000000e+00 : f32
    %237 = vector.broadcast %cst_100 : f32 to vector<8x1xf32>
    %238 = arith.subf %237, %236 : vector<8x1xf32>
    %239 = math.exp %238 : vector<8x1xf32>
    %cst_101 = arith.constant 1.000000e+00 : f32
    %240 = vector.broadcast %cst_101 : f32 to vector<8x1xf32>
    %241 = arith.addf %240, %239 : vector<8x1xf32>
    %242 = math.log %241 : vector<8x1xf32>
    %243 = arith.addf %235, %242 : vector<8x1xf32>
    %cst_102 = arith.constant dense<0.000000e+00> : vector<1xf32>
    %244 = vector.multi_reduction <add>, %243, %cst_102 [0] : vector<8x1xf32> to vector<1xf32>
    %245 = vector.shape_cast %244 : vector<1xf32> to vector<1x1xf32>
    %cst_103 = arith.constant 8.000000e+00 : f32
    %246 = vector.broadcast %cst_103 : f32 to vector<1x1xf32>
    %247 = arith.divf %245, %246 : vector<1x1xf32>
    %cst_104 = arith.constant 0.142857149 : f32
    %248 = vector.broadcast %cst_104 : f32 to vector<1x1xf32>
    %249 = arith.mulf %248, %247 : vector<1x1xf32>
    %250 = arith.addf %228, %249 : vector<1x1xf32>
    %c0_105 = arith.constant 0 : index
    %251 = memref.load %arg0[%c0_105] : memref<1xf32, #tpu.memory_space<smem>>
    %252 = vector.broadcast %251 : f32 to vector<1x1xf32>
    %253 = math.exp %252 : vector<1x1xf32>
    %c0_106 = arith.constant 0 : index
    %c0_107 = arith.constant 0 : index
    %254 = vector.load %arg19[%c0_106, %c0_107] : memref<8x32xf32, #tpu.memory_space<vmem>>, vector<8x32xf32>
    %c0_108 = arith.constant 0 : index
    %c0_109 = arith.constant 0 : index
    %255 = vector.load %arg22[%c0_108, %c0_109] : memref<8x32xf32, #tpu.memory_space<vmem>>, vector<8x32xf32>
    %cst_110 = arith.constant dense<0.000000e+00> : vector<8x8xf32>
    %256 = tpu.matmul %254, %255, %cst_110 {dimension_numbers = #tpu.dot_dimension_numbers<[1], [1], [0], [0], [0, 0, 1, 0], [], []>} : vector<8x32xf32>, vector<8x32xf32>, vector<8x8xf32> -> vector<8x8xf32>
    %257 = vector.broadcast %253 : vector<1x1xf32> to vector<8x8xf32>
    %258 = arith.mulf %257, %256 : vector<8x8xf32>
    %cst_111 = arith.constant dense<0xFF800000> : vector<8xf32>
    %259 = vector.multi_reduction <maximumf>, %258, %cst_111 [1] : vector<8x8xf32> to vector<8xf32>
    %260 = vector.shape_cast %259 : vector<8xf32> to vector<8x1xf32>
    %261 = vector.broadcast %260 : vector<8x1xf32> to vector<8x8xf32>
    %262 = arith.subf %258, %261 : vector<8x8xf32>
    %263 = math.exp %262 : vector<8x8xf32>
    %cst_112 = arith.constant dense<0.000000e+00> : vector<8xf32>
    %264 = vector.multi_reduction <add>, %263, %cst_112 [1] : vector<8x8xf32> to vector<8xf32>
    %265 = vector.shape_cast %264 : vector<8xf32> to vector<8x1xf32>
    %266 = math.log %265 : vector<8x1xf32>
    %267 = arith.addf %266, %260 : vector<8x1xf32>
    %cst_113 = arith.constant dense<0xFF800000> : vector<8xf32>
    %268 = vector.multi_reduction <maximumf>, %258, %cst_113 [0] : vector<8x8xf32> to vector<8xf32>
    %269 = vector.shape_cast %268 : vector<8xf32> to vector<1x8xf32>
    %270 = vector.broadcast %269 : vector<1x8xf32> to vector<8x8xf32>
    %271 = arith.subf %258, %270 : vector<8x8xf32>
    %272 = math.exp %271 : vector<8x8xf32>
    %cst_114 = arith.constant dense<0.000000e+00> : vector<8xf32>
    %273 = vector.multi_reduction <add>, %272, %cst_114 [0] : vector<8x8xf32> to vector<8xf32>
    %274 = vector.shape_cast %273 : vector<8xf32> to vector<1x8xf32>
    %275 = math.log %274 : vector<1x8xf32>
    %276 = arith.addf %275, %269 : vector<1x8xf32>
    %277 = tpu.iota {dimensions = array<i32: 0>} : vector<8x8xi32>
    %278 = tpu.iota {dimensions = array<i32: 1>} : vector<8x8xi32>
    %279 = arith.cmpi eq, %277, %278 : vector<8x8xi32>
    %cst_115 = arith.constant 0.000000e+00 : f32
    %280 = vector.broadcast %cst_115 : f32 to vector<8x8xf32>
    %281 = arith.select %279, %258, %280 : vector<8x8xi1>, vector<8x8xf32>
    %282 = vector.shape_cast %281 : vector<8x8xf32> to vector<1x8x8xf32>
    %cst_116 = arith.constant dense<0.000000e+00> : vector<1xf32>
    %283 = vector.multi_reduction <add>, %282, %cst_116 [1, 2] : vector<1x8x8xf32> to vector<1xf32>
    %284 = vector.shape_cast %283 : vector<1xf32> to vector<1x1x1xf32>
    %285 = vector.extract %284[0, 0, 0] : f32 from vector<1x1x1xf32>
    %286 = vector.broadcast %285 : f32 to vector<1x1xf32>
    %cst_117 = arith.constant 8.000000e+00 : f32
    %287 = vector.broadcast %cst_117 : f32 to vector<1x1xf32>
    %288 = arith.divf %286, %287 : vector<1x1xf32>
    %cst_118 = arith.constant dense<0.000000e+00> : vector<1xf32>
    %289 = vector.multi_reduction <add>, %267, %cst_118 [0] : vector<8x1xf32> to vector<1xf32>
    %290 = vector.shape_cast %289 : vector<1xf32> to vector<1x1xf32>
    %cst_119 = arith.constant 8.000000e+00 : f32
    %291 = vector.broadcast %cst_119 : f32 to vector<1x1xf32>
    %292 = arith.divf %290, %291 : vector<1x1xf32>
    %cst_120 = arith.constant dense<0.000000e+00> : vector<1xf32>
    %293 = vector.multi_reduction <add>, %276, %cst_120 [1] : vector<1x8xf32> to vector<1xf32>
    %294 = vector.shape_cast %293 : vector<1xf32> to vector<1x1xf32>
    %cst_121 = arith.constant 8.000000e+00 : f32
    %295 = vector.broadcast %cst_121 : f32 to vector<1x1xf32>
    %296 = arith.divf %294, %295 : vector<1x1xf32>
    %297 = arith.addf %292, %296 : vector<1x1xf32>
    %cst_122 = arith.constant 5.000000e-01 : f32
    %298 = vector.broadcast %cst_122 : f32 to vector<1x1xf32>
    %299 = arith.mulf %298, %297 : vector<1x1xf32>
    %300 = arith.subf %299, %288 : vector<1x1xf32>
    %301 = arith.addf %250, %300 : vector<1x1xf32>
    %c0_123 = arith.constant 0 : index
    %c0_124 = arith.constant 0 : index
    %302 = vector.load %arg20[%c0_123, %c0_124] : memref<8x32xf32, #tpu.memory_space<vmem>>, vector<8x32xf32>
    %c0_125 = arith.constant 0 : index
    %c0_126 = arith.constant 0 : index
    %303 = vector.load %arg23[%c0_125, %c0_126] : memref<8x32xf32, #tpu.memory_space<vmem>>, vector<8x32xf32>
    %cst_127 = arith.constant dense<0.000000e+00> : vector<8x8xf32>
    %304 = tpu.matmul %302, %303, %cst_127 {dimension_numbers = #tpu.dot_dimension_numbers<[1], [1], [0], [0], [0, 0, 1, 0], [], []>} : vector<8x32xf32>, vector<8x32xf32>, vector<8x8xf32> -> vector<8x8xf32>
    %305 = vector.broadcast %253 : vector<1x1xf32> to vector<8x8xf32>
    %306 = arith.mulf %305, %304 : vector<8x8xf32>
    %cst_128 = arith.constant dense<0xFF800000> : vector<8xf32>
    %307 = vector.multi_reduction <maximumf>, %306, %cst_128 [1] : vector<8x8xf32> to vector<8xf32>
    %308 = vector.shape_cast %307 : vector<8xf32> to vector<8x1xf32>
    %309 = vector.broadcast %308 : vector<8x1xf32> to vector<8x8xf32>
    %310 = arith.subf %306, %309 : vector<8x8xf32>
    %311 = math.exp %310 : vector<8x8xf32>
    %cst_129 = arith.constant dense<0.000000e+00> : vector<8xf32>
    %312 = vector.multi_reduction <add>, %311, %cst_129 [1] : vector<8x8xf32> to vector<8xf32>
    %313 = vector.shape_cast %312 : vector<8xf32> to vector<8x1xf32>
    %314 = math.log %313 : vector<8x1xf32>
    %315 = arith.addf %314, %308 : vector<8x1xf32>
    %cst_130 = arith.constant dense<0xFF800000> : vector<8xf32>
    %316 = vector.multi_reduction <maximumf>, %306, %cst_130 [0] : vector<8x8xf32> to vector<8xf32>
    %317 = vector.shape_cast %316 : vector<8xf32> to vector<1x8xf32>
    %318 = vector.broadcast %317 : vector<1x8xf32> to vector<8x8xf32>
    %319 = arith.subf %306, %318 : vector<8x8xf32>
    %320 = math.exp %319 : vector<8x8xf32>
    %cst_131 = arith.constant dense<0.000000e+00> : vector<8xf32>
    %321 = vector.multi_reduction <add>, %320, %cst_131 [0] : vector<8x8xf32> to vector<8xf32>
    %322 = vector.shape_cast %321 : vector<8xf32> to vector<1x8xf32>
    %323 = math.log %322 : vector<1x8xf32>
    %324 = arith.addf %323, %317 : vector<1x8xf32>
    %325 = tpu.iota {dimensions = array<i32: 0>} : vector<8x8xi32>
    %326 = tpu.iota {dimensions = array<i32: 1>} : vector<8x8xi32>
    %327 = arith.cmpi eq, %325, %326 : vector<8x8xi32>
    %cst_132 = arith.constant 0.000000e+00 : f32
    %328 = vector.broadcast %cst_132 : f32 to vector<8x8xf32>
    %329 = arith.select %327, %306, %328 : vector<8x8xi1>, vector<8x8xf32>
    %330 = vector.shape_cast %329 : vector<8x8xf32> to vector<1x8x8xf32>
    %cst_133 = arith.constant dense<0.000000e+00> : vector<1xf32>
    %331 = vector.multi_reduction <add>, %330, %cst_133 [1, 2] : vector<1x8x8xf32> to vector<1xf32>
    %332 = vector.shape_cast %331 : vector<1xf32> to vector<1x1x1xf32>
    %333 = vector.extract %332[0, 0, 0] : f32 from vector<1x1x1xf32>
    %334 = vector.broadcast %333 : f32 to vector<1x1xf32>
    %cst_134 = arith.constant 8.000000e+00 : f32
    %335 = vector.broadcast %cst_134 : f32 to vector<1x1xf32>
    %336 = arith.divf %334, %335 : vector<1x1xf32>
    %cst_135 = arith.constant dense<0.000000e+00> : vector<1xf32>
    %337 = vector.multi_reduction <add>, %315, %cst_135 [0] : vector<8x1xf32> to vector<1xf32>
    %338 = vector.shape_cast %337 : vector<1xf32> to vector<1x1xf32>
    %cst_136 = arith.constant 8.000000e+00 : f32
    %339 = vector.broadcast %cst_136 : f32 to vector<1x1xf32>
    %340 = arith.divf %338, %339 : vector<1x1xf32>
    %cst_137 = arith.constant dense<0.000000e+00> : vector<1xf32>
    %341 = vector.multi_reduction <add>, %324, %cst_137 [1] : vector<1x8xf32> to vector<1xf32>
    %342 = vector.shape_cast %341 : vector<1xf32> to vector<1x1xf32>
    %cst_138 = arith.constant 8.000000e+00 : f32
    %343 = vector.broadcast %cst_138 : f32 to vector<1x1xf32>
    %344 = arith.divf %342, %343 : vector<1x1xf32>
    %345 = arith.addf %340, %344 : vector<1x1xf32>
    %cst_139 = arith.constant 5.000000e-01 : f32
    %346 = vector.broadcast %cst_139 : f32 to vector<1x1xf32>
    %347 = arith.mulf %346, %345 : vector<1x1xf32>
    %348 = arith.subf %347, %336 : vector<1x1xf32>
    %349 = arith.addf %301, %348 : vector<1x1xf32>
    %c0_140 = arith.constant 0 : index
    %c0_141 = arith.constant 0 : index
    %350 = vector.load %arg21[%c0_140, %c0_141] : memref<8x32xf32, #tpu.memory_space<vmem>>, vector<8x32xf32>
    %c0_142 = arith.constant 0 : index
    %c0_143 = arith.constant 0 : index
    %351 = vector.load %arg24[%c0_142, %c0_143] : memref<8x32xf32, #tpu.memory_space<vmem>>, vector<8x32xf32>
    %cst_144 = arith.constant dense<0.000000e+00> : vector<8x8xf32>
    %352 = tpu.matmul %350, %351, %cst_144 {dimension_numbers = #tpu.dot_dimension_numbers<[1], [1], [0], [0], [0, 0, 1, 0], [], []>} : vector<8x32xf32>, vector<8x32xf32>, vector<8x8xf32> -> vector<8x8xf32>
    %c0_145 = arith.constant 0 : index
    %c0_146 = arith.constant 0 : index
    %353 = vector.load %arg26[%c0_145, %c0_146] : memref<8x8xf32, #tpu.memory_space<vmem>>, vector<8x8xf32>
    tpu.vector_store %arg26[%c0_145, %c0_146], %352 {strides = array<i32>} : memref<8x8xf32, #tpu.memory_space<vmem>>, vector<8x8xf32>,
    %354 = vector.broadcast %253 : vector<1x1xf32> to vector<8x8xf32>
    %355 = arith.mulf %354, %352 : vector<8x8xf32>
    %cst_147 = arith.constant dense<0xFF800000> : vector<8xf32>
    %356 = vector.multi_reduction <maximumf>, %355, %cst_147 [1] : vector<8x8xf32> to vector<8xf32>
    %357 = vector.shape_cast %356 : vector<8xf32> to vector<8x1xf32>
    %358 = vector.broadcast %357 : vector<8x1xf32> to vector<8x8xf32>
    %359 = arith.subf %355, %358 : vector<8x8xf32>
    %360 = math.exp %359 : vector<8x8xf32>
    %cst_148 = arith.constant dense<0.000000e+00> : vector<8xf32>
    %361 = vector.multi_reduction <add>, %360, %cst_148 [1] : vector<8x8xf32> to vector<8xf32>
    %362 = vector.shape_cast %361 : vector<8xf32> to vector<8x1xf32>
    %363 = math.log %362 : vector<8x1xf32>
    %364 = arith.addf %363, %357 : vector<8x1xf32>
    %cst_149 = arith.constant dense<0xFF800000> : vector<8xf32>
    %365 = vector.multi_reduction <maximumf>, %355, %cst_149 [0] : vector<8x8xf32> to vector<8xf32>
    %366 = vector.shape_cast %365 : vector<8xf32> to vector<1x8xf32>
    %367 = vector.broadcast %366 : vector<1x8xf32> to vector<8x8xf32>
    %368 = arith.subf %355, %367 : vector<8x8xf32>
    %369 = math.exp %368 : vector<8x8xf32>
    %cst_150 = arith.constant dense<0.000000e+00> : vector<8xf32>
    %370 = vector.multi_reduction <add>, %369, %cst_150 [0] : vector<8x8xf32> to vector<8xf32>
    %371 = vector.shape_cast %370 : vector<8xf32> to vector<1x8xf32>
    %372 = math.log %371 : vector<1x8xf32>
    %373 = arith.addf %372, %366 : vector<1x8xf32>
    %374 = tpu.iota {dimensions = array<i32: 0>} : vector<8x8xi32>
    %375 = tpu.iota {dimensions = array<i32: 1>} : vector<8x8xi32>
    %376 = arith.cmpi eq, %374, %375 : vector<8x8xi32>
    %cst_151 = arith.constant 0.000000e+00 : f32
    %377 = vector.broadcast %cst_151 : f32 to vector<8x8xf32>
    %378 = arith.select %376, %355, %377 : vector<8x8xi1>, vector<8x8xf32>
    %379 = vector.shape_cast %378 : vector<8x8xf32> to vector<1x8x8xf32>
    %cst_152 = arith.constant dense<0.000000e+00> : vector<1xf32>
    %380 = vector.multi_reduction <add>, %379, %cst_152 [1, 2] : vector<1x8x8xf32> to vector<1xf32>
    %381 = vector.shape_cast %380 : vector<1xf32> to vector<1x1x1xf32>
    %382 = vector.extract %381[0, 0, 0] : f32 from vector<1x1x1xf32>
    %383 = vector.broadcast %382 : f32 to vector<1x1xf32>
    %cst_153 = arith.constant 8.000000e+00 : f32
    %384 = vector.broadcast %cst_153 : f32 to vector<1x1xf32>
    %385 = arith.divf %383, %384 : vector<1x1xf32>
    %cst_154 = arith.constant dense<0.000000e+00> : vector<1xf32>
    %386 = vector.multi_reduction <add>, %364, %cst_154 [0] : vector<8x1xf32> to vector<1xf32>
    %387 = vector.shape_cast %386 : vector<1xf32> to vector<1x1xf32>
    %cst_155 = arith.constant 8.000000e+00 : f32
    %388 = vector.broadcast %cst_155 : f32 to vector<1x1xf32>
    %389 = arith.divf %387, %388 : vector<1x1xf32>
    %cst_156 = arith.constant dense<0.000000e+00> : vector<1xf32>
    %390 = vector.multi_reduction <add>, %373, %cst_156 [1] : vector<1x8xf32> to vector<1xf32>
    %391 = vector.shape_cast %390 : vector<1xf32> to vector<1x1xf32>
    %cst_157 = arith.constant 8.000000e+00 : f32
    %392 = vector.broadcast %cst_157 : f32 to vector<1x1xf32>
    %393 = arith.divf %391, %392 : vector<1x1xf32>
    %394 = arith.addf %389, %393 : vector<1x1xf32>
    %cst_158 = arith.constant 5.000000e-01 : f32
    %395 = vector.broadcast %cst_158 : f32 to vector<1x1xf32>
    %396 = arith.mulf %395, %394 : vector<1x1xf32>
    %397 = arith.subf %396, %385 : vector<1x1xf32>
    %398 = arith.addf %349, %397 : vector<1x1xf32>
    %399 = vector.shape_cast %398 : vector<1x1xf32> to vector<1x1x1xf32>
    %cst_159 = arith.constant dense<0.000000e+00> : vector<1xf32>
    %400 = vector.multi_reduction <add>, %399, %cst_159 [1, 2] : vector<1x1x1xf32> to vector<1xf32>
    %401 = vector.shape_cast %400 : vector<1xf32> to vector<1x1x1xf32>
    %402 = vector.extract %401[0, 0, 0] : f32 from vector<1x1x1xf32>
    %c0_160 = arith.constant 0 : index
    %c0_161 = arith.constant 0 : index
    %403 = memref.load %arg25[%c0_160, %c0_161] : memref<1x1xf32, #tpu.memory_space<smem>>
    memref.store %402, %arg25[%c0_160, %c0_161] : memref<1x1xf32, #tpu.memory_space<smem>>
    return
  }
}

</mosaic_0001>

<llo_original>
// kernel: _lambda_.1
$region0: #{_lambda_.1}
  #allocation0 [shape = 'u32[]', space=smem, size = 0x4, offset = 0x4, fixed_abs, tag = 'smem constant byte address 0x4 - core index']
  #allocation1 [shape = 'u32[144,128]{1,0:T(1,128)}', space=vmem, size = 0x12000, scoped, tag = 'internal scratch']
  #allocation2 [shape = 'f32[1]{0:T(128)S(6)}', space=smem, size = 0x200, scoped, tag = 'scoped memory for _lambda_.1']
  %s0 = inlined_call_operand.<no memory space> [shape: f32[1], index: 0, kind: input, shape index: {}]
  %s1 = inlined_call_operand.vmem [shape: f32[8,8], index: 1, kind: input, shape index: {}]
  %s2 = inlined_call_operand.vmem [shape: f32[8,8], index: 2, kind: input, shape index: {}]
  %s3 = inlined_call_operand.vmem [shape: f32[8,4], index: 3, kind: input, shape index: {}]
  %s4 = inlined_call_operand.vmem [shape: f32[8,8], index: 4, kind: input, shape index: {}]
  %s5 = inlined_call_operand.vmem [shape: f32[8,8], index: 5, kind: input, shape index: {}]
  %s6 = inlined_call_operand.vmem [shape: f32[8,4], index: 6, kind: input, shape index: {}]
  %s7 = inlined_call_operand.vmem [shape: f32[8,16], index: 7, kind: input, shape index: {}]
  %s8 = inlined_call_operand.vmem [shape: f32[8,16], index: 8, kind: input, shape index: {}]
  %s9 = inlined_call_operand.vmem [shape: s32[8,1], index: 9, kind: input, shape index: {}]
  %s10 = inlined_call_operand.vmem [shape: s32[8,1], index: 10, kind: input, shape index: {}]
  %s11 = inlined_call_operand.vmem [shape: s32[8,1], index: 11, kind: input, shape index: {}]
  %s12 = inlined_call_operand.vmem [shape: s32[8,1], index: 12, kind: input, shape index: {}]
  %s13 = inlined_call_operand.vmem [shape: s32[8,1], index: 13, kind: input, shape index: {}]
  %s14 = inlined_call_operand.vmem [shape: s32[8,1], index: 14, kind: input, shape index: {}]
  %s15 = inlined_call_operand.vmem [shape: s32[8,1], index: 15, kind: input, shape index: {}, may-alias: {15,16}]
  %s16 = inlined_call_operand.vmem [shape: s32[8,1], index: 16, kind: input, shape index: {}, may-alias: {15,16}]
  %s17 = inlined_call_operand.vmem [shape: f32[8,1], index: 17, kind: input, shape index: {}]
  %s18 = inlined_call_operand.vmem [shape: s32[8,1], index: 18, kind: input, shape index: {}]
  %s19 = inlined_call_operand.vmem [shape: f32[8,32], index: 19, kind: input, shape index: {}]
  %s20 = inlined_call_operand.vmem [shape: f32[8,32], index: 20, kind: input, shape index: {}]
  %s21 = inlined_call_operand.vmem [shape: f32[8,32], index: 21, kind: input, shape index: {}]
  %s22 = inlined_call_operand.vmem [shape: f32[8,32], index: 22, kind: input, shape index: {}]
  %s23 = inlined_call_operand.vmem [shape: f32[8,32], index: 23, kind: input, shape index: {}]
  %s24 = inlined_call_operand.vmem [shape: f32[8,32], index: 24, kind: input, shape index: {}]
  %s25 = inlined_call_operand.hbm [shape: f32[1,1], index: 25, kind: output, shape index: {0}]
  %s26 = inlined_call_operand.hbm [shape: f32[8,8], index: 26, kind: output, shape index: {1}]
  %27 = xla_tuple %s25, %s26
  %s28 = sld [smem:[#allocation0]]
  $region118: #{_lambda_.1} parent=0
    _
  %s30 = ssub.s32 1, %s28
  %s31 = scalar_select 0, %s30, %s28
  %32 = sst [smem:[#allocation2]] %s0
  $region1: #{_lambda_.1} parent=0
    #allocation3 [shape = 'u8[512]{0}', space=smem, size = 0x200, scoped, tag = 'output window, operand 0, single buffered']
    #allocation4 [shape = 's32[1]{0}', space=sflag, size = 0x4, scoped, tag = 'scoped memory for _lambda_.1']
    #allocation5 [shape = 's32[1]{0}', space=sflag, size = 0x4, scoped, tag = 'scoped memory for _lambda_.1']
    #allocation6 [shape = 'u8[4096]{0}', space=vmem, size = 0x1000, scoped, tag = 'output window, operand 1, single buffered']
    %33 = vsyncpa [#allocation5], 0
    %34 = vsyncpa [#allocation4], 0
    // Predicated region
    $region2: #{_lambda_.1} parent=1 // pred_check
      _
    $region3: #{_lambda_.1} parent=1 // pred_check_branch
      %36 = sbr.rel (0) target = $region5
    $region4: #{_lambda_.1} parent=1 // pred_region
      _
    $region5: #{_lambda_.1} parent=1 // pred_fallthru
      _
    // Predicated region
    $region6: #{_lambda_.1} parent=1 // pred_check
      _
    $region7: #{_lambda_.1} parent=1 // pred_check_branch
      %38 = sbr.rel (0) target = $region9
    $region8: #{_lambda_.1} parent=1 // pred_region
      _
    $region9: #{_lambda_.1} parent=1 // pred_fallthru
      _
    // Predicated region
    $region10: #{_lambda_.1} parent=1 // pred_check
      _
    $region11: #{_lambda_.1} parent=1 // pred_check_branch
      %40 = sbr.rel (0) target = $region13
    $region12: #{_lambda_.1} parent=1 // pred_region
      _
    $region13: #{_lambda_.1} parent=1 // pred_fallthru
      _
    // Predicated region
    $region14: #{_lambda_.1} parent=1 // pred_check
      _
    $region15: #{_lambda_.1} parent=1 // pred_check_branch
      %42 = sbr.rel (0) target = $region17
    $region16: #{_lambda_.1} parent=1 // pred_region
      _
    $region17: #{_lambda_.1} parent=1 // pred_fallthru
      _
    // Predicated region
    $region18: #{_lambda_.1} parent=1 // pred_check
      _
    $region19: #{_lambda_.1} parent=1 // pred_check_branch
      %44 = sbr.rel (0) target = $region21
    $region20: #{_lambda_.1} parent=1 // pred_region
      _
    $region21: #{_lambda_.1} parent=1 // pred_fallthru
      _
    // Predicated region
    $region22: #{_lambda_.1} parent=1 // pred_check
      _
    $region23: #{_lambda_.1} parent=1 // pred_check_branch
      %46 = sbr.rel (0) target = $region25
    $region24: #{_lambda_.1} parent=1 // pred_region
      _
    $region25: #{_lambda_.1} parent=1 // pred_fallthru
      _
    // Predicated region
    $region26: #{_lambda_.1} parent=1 // pred_check
      _
    $region27: #{_lambda_.1} parent=1 // pred_check_branch
      %48 = sbr.rel (0) target = $region29
    $region28: #{_lambda_.1} parent=1 // pred_region
      _
    $region29: #{_lambda_.1} parent=1 // pred_fallthru
      _
    // Predicated region
    $region30: #{_lambda_.1} parent=1 // pred_check
      _
    $region31: #{_lambda_.1} parent=1 // pred_check_branch
      %50 = sbr.rel (0) target = $region33
    $region32: #{_lambda_.1} parent=1 // pred_region
      _
    $region33: #{_lambda_.1} parent=1 // pred_fallthru
      _
    // Predicated region
    $region34: #{_lambda_.1} parent=1 // pred_check
      _
    $region35: #{_lambda_.1} parent=1 // pred_check_branch
      %52 = sbr.rel (0) target = $region37
    $region36: #{_lambda_.1} parent=1 // pred_region
      _
    $region37: #{_lambda_.1} parent=1 // pred_fallthru
      _
    // Predicated region
    $region38: #{_lambda_.1} parent=1 // pred_check
      _
    $region39: #{_lambda_.1} parent=1 // pred_check_branch
      %54 = sbr.rel (0) target = $region41
    $region40: #{_lambda_.1} parent=1 // pred_region
      _
    $region41: #{_lambda_.1} parent=1 // pred_fallthru
      _
    // Predicated region
    $region42: #{_lambda_.1} parent=1 // pred_check
      _
    $region43: #{_lambda_.1} parent=1 // pred_check_branch
      %56 = sbr.rel (0) target = $region45
    $region44: #{_lambda_.1} parent=1 // pred_region
      _
    $region45: #{_lambda_.1} parent=1 // pred_fallthru
      _
    // Predicated region
    $region46: #{_lambda_.1} parent=1 // pred_check
      _
    $region47: #{_lambda_.1} parent=1 // pred_check_branch
      %58 = sbr.rel (0) target = $region49
    $region48: #{_lambda_.1} parent=1 // pred_region
      _
    $region49: #{_lambda_.1} parent=1 // pred_fallthru
      _
    // Predicated region
    $region50: #{_lambda_.1} parent=1 // pred_check
      _
    $region51: #{_lambda_.1} parent=1 // pred_check_branch
      %60 = sbr.rel (0) target = $region53
    $region52: #{_lambda_.1} parent=1 // pred_region
      _
    $region53: #{_lambda_.1} parent=1 // pred_fallthru
      _
    // Predicated region
    $region54: #{_lambda_.1} parent=1 // pred_check
      _
    $region55: #{_lambda_.1} parent=1 // pred_check_branch
      %62 = sbr.rel (0) target = $region57
    $region56: #{_lambda_.1} parent=1 // pred_region
      _
    $region57: #{_lambda_.1} parent=1 // pred_fallthru
      _
    // Predicated region
    $region58: #{_lambda_.1} parent=1 // pred_check
      _
    $region59: #{_lambda_.1} parent=1 // pred_check_branch
      %64 = sbr.rel (0) target = $region61
    $region60: #{_lambda_.1} parent=1 // pred_region
      _
    $region61: #{_lambda_.1} parent=1 // pred_fallthru
      _
    // Predicated region
    $region62: #{_lambda_.1} parent=1 // pred_check
      _
    $region63: #{_lambda_.1} parent=1 // pred_check_branch
      %66 = sbr.rel (0) target = $region65
    $region64: #{_lambda_.1} parent=1 // pred_region
      _
    $region65: #{_lambda_.1} parent=1 // pred_fallthru
      _
    // Predicated region
    $region66: #{_lambda_.1} parent=1 // pred_check
      _
    $region67: #{_lambda_.1} parent=1 // pred_check_branch
      %68 = sbr.rel (0) target = $region69
    $region68: #{_lambda_.1} parent=1 // pred_region
      _
    $region69: #{_lambda_.1} parent=1 // pred_fallthru
      _
    // Predicated region
    $region70: #{_lambda_.1} parent=1 // pred_check
      _
    $region71: #{_lambda_.1} parent=1 // pred_check_branch
      %70 = sbr.rel (0) target = $region73
    $region72: #{_lambda_.1} parent=1 // pred_region
      _
    $region73: #{_lambda_.1} parent=1 // pred_fallthru
      _
    // Predicated region
    $region74: #{_lambda_.1} parent=1 // pred_check
      _
    $region75: #{_lambda_.1} parent=1 // pred_check_branch
      %72 = sbr.rel (0) target = $region77
    $region76: #{_lambda_.1} parent=1 // pred_region
      _
    $region77: #{_lambda_.1} parent=1 // pred_fallthru
      _
    // Predicated region
    $region78: #{_lambda_.1} parent=1 // pred_check
      _
    $region79: #{_lambda_.1} parent=1 // pred_check_branch
      %74 = sbr.rel (0) target = $region81
    $region80: #{_lambda_.1} parent=1 // pred_region
      _
    $region81: #{_lambda_.1} parent=1 // pred_fallthru
      _
    // Predicated region
    $region82: #{_lambda_.1} parent=1 // pred_check
      _
    $region83: #{_lambda_.1} parent=1 // pred_check_branch
      %76 = sbr.rel (0) target = $region85
    $region84: #{_lambda_.1} parent=1 // pred_region
      _
    $region85: #{_lambda_.1} parent=1 // pred_fallthru
      _
    // Predicated region
    $region86: #{_lambda_.1} parent=1 // pred_check
      _
    $region87: #{_lambda_.1} parent=1 // pred_check_branch
      %78 = sbr.rel (0) target = $region89
    $region88: #{_lambda_.1} parent=1 // pred_region
      _
    $region89: #{_lambda_.1} parent=1 // pred_fallthru
      _
    // Predicated region
    $region90: #{_lambda_.1} parent=1 // pred_check
      _
    $region91: #{_lambda_.1} parent=1 // pred_check_branch
      %80 = sbr.rel (0) target = $region93
    $region92: #{_lambda_.1} parent=1 // pred_region
      _
    $region93: #{_lambda_.1} parent=1 // pred_fallthru
      _
    // Predicated region
    $region94: #{_lambda_.1} parent=1 // pred_check
      _
    $region95: #{_lambda_.1} parent=1 // pred_check_branch
      %82 = sbr.rel (0) target = $region97
    $region96: #{_lambda_.1} parent=1 // pred_region
      _
    $region97: #{_lambda_.1} parent=1 // pred_fallthru
      _
    // Predicated region
    $region98: #{_lambda_.1} parent=1 // pred_check
      _
    $region99: #{_lambda_.1} parent=1 // pred_check_branch
      %84 = sbr.rel (0) target = $region101
    $region100: #{_lambda_.1} parent=1 // pred_region
      _
    $region101: #{_lambda_.1} parent=1 // pred_fallthru
      _
    %v85 = vld [vmem:[%s1] sm:$0xff]
    %v86 = vld [vmem:[%s9] sm:$0xff]
    %vm87 = vcmask 64512
    %v88 = vsel %vm87, %v85, -inf
    %89 = vmax.xlane.f32.xlu0 %v88
    %v90 = vpop.xlane.xlu0 %89
    %v91 = vsub.f32 %v85, %v90
    %v92 = vmul.f32 %v91, 1.442695
    %v93 = vpow.pop %v92
    %v94 = vsel %vm87, %v93, 0.0
    %95 = vadd.xlane.f32.xlu0 %v94
    %v96 = vpop.xlane.xlu0 %95
    %v97 = vlog2.pop %v96
    %v98 = vmul.f32 %v97, 0.6931472
    %v99 = vadd.f32 %v98, %v90
    %v100 = vlaneseq
    %v101 = vand.u32 %v100, 127
    %102 = vset.pattern.permute.xlu0 0
    %103 = vperm.xlu0 %102, %v86
    %v104 = vpop.permute.xlu0 %103
    %vm105 = vcmp.eq.s32.totalorder %v101, %v104
    %v106 = vsel %vm105, %v85, 0.0
    %v107 = vsel %vm87, %v106, 0.0
    %108 = vadd.xlane.f32.xlu0 %v107
    %v109 = vpop.xlane.xlu0 %108
    %v110 = vsub.f32 %v99, %v109
    %v111 = vrot.slane %v110, 4
    %v112 = vadd.f32 %v110, %v111
    %v113 = vrot.slane %v112, 2
    %v114 = vadd.f32 %v112, %v113
    %v115 = vrot.slane %v114, 1
    %v116 = vadd.f32 %v114, %v115
    %v117 = vrcp.pop 8.0
    %v118 = vmul.f32 %v116, %v117
    %v119 = vmul.f32 %v118, 0.14285715
    %v120 = vadd.f32 %v119, 0.0
    %v121 = vld [vmem:[%s2] sm:$0xff]
    %v122 = vld [vmem:[%s10] sm:$0xff]
    %v123 = vsel %vm87, %v121, -inf
    %124 = vmax.xlane.f32.xlu0 %v123
    %v125 = vpop.xlane.xlu0 %124
    %v126 = vsub.f32 %v121, %v125
    %v127 = vmul.f32 %v126, 1.442695
    %v128 = vpow.pop %v127
    %v129 = vsel %vm87, %v128, 0.0
    %130 = vadd.xlane.f32.xlu0 %v129
    %v131 = vpop.xlane.xlu0 %130
    %v132 = vlog2.pop %v131
    %v133 = vmul.f32 %v132, 0.6931472
    %v134 = vadd.f32 %v133, %v125
    %135 = vset.pattern.permute.xlu0 0
    %136 = vperm.xlu0 %135, %v122
    %v137 = vpop.permute.xlu0 %136
    %vm138 = vcmp.eq.s32.totalorder %v101, %v137
    %v139 = vsel %vm138, %v121, 0.0
    %v140 = vsel %vm87, %v139, 0.0
    %141 = vadd.xlane.f32.xlu0 %v140
    %v142 = vpop.xlane.xlu0 %141
    %v143 = vsub.f32 %v134, %v142
    %v144 = vrot.slane %v143, 4
    %v145 = vadd.f32 %v143, %v144
    %v146 = vrot.slane %v145, 2
    %v147 = vadd.f32 %v145, %v146
    %v148 = vrot.slane %v147, 1
    %v149 = vadd.f32 %v147, %v148
    %v150 = vmul.f32 %v149, %v117
    %v151 = vmul.f32 %v150, 0.14285715
    %v152 = vadd.f32 %v120, %v151
    %v153 = vld [vmem:[%s3] sm:$0xff]
    %v154 = vld [vmem:[%s11] sm:$0xff]
    %vm155 = vcmask 31744
    %v156 = vsel %vm155, %v153, -inf
    %157 = vmax.xlane.f32.xlu0 %v156
    %v158 = vpop.xlane.xlu0 %157
    %v159 = vsub.f32 %v153, %v158
    %v160 = vmul.f32 %v159, 1.442695
    %v161 = vpow.pop %v160
    %v162 = vsel %vm155, %v161, 0.0
    %163 = vadd.xlane.f32.xlu0 %v162
    %v164 = vpop.xlane.xlu0 %163
    %v165 = vlog2.pop %v164
    %v166 = vmul.f32 %v165, 0.6931472
    %v167 = vadd.f32 %v166, %v158
    %168 = vset.pattern.permute.xlu0 0
    %169 = vperm.xlu0 %168, %v154
    %v170 = vpop.permute.xlu0 %169
    %vm171 = vcmp.eq.s32.totalorder %v101, %v170
    %v172 = vsel %vm171, %v153, 0.0
    %v173 = vsel %vm155, %v172, 0.0
    %174 = vadd.xlane.f32.xlu0 %v173
    %v175 = vpop.xlane.xlu0 %174
    %v176 = vsub.f32 %v167, %v175
    %v177 = vrot.slane %v176, 4
    %v178 = vadd.f32 %v176, %v177
    %v179 = vrot.slane %v178, 2
    %v180 = vadd.f32 %v178, %v179
    %v181 = vrot.slane %v180, 1
    %v182 = vadd.f32 %v180, %v181
    %v183 = vmul.f32 %v182, %v117
    %v184 = vmul.f32 %v183, 0.14285715
    %v185 = vadd.f32 %v152, %v184
    %v186 = vld [vmem:[%s4] sm:$0xff]
    %v187 = vld [vmem:[%s12] sm:$0xff]
    %v188 = vsel %vm87, %v186, -inf
    %189 = vmax.xlane.f32.xlu0 %v188
    %v190 = vpop.xlane.xlu0 %189
    %v191 = vsub.f32 %v186, %v190
    %v192 = vmul.f32 %v191, 1.442695
    %v193 = vpow.pop %v192
    %v194 = vsel %vm87, %v193, 0.0
    %195 = vadd.xlane.f32.xlu0 %v194
    %v196 = vpop.xlane.xlu0 %195
    %v197 = vlog2.pop %v196
    %v198 = vmul.f32 %v197, 0.6931472
    %v199 = vadd.f32 %v198, %v190
    %200 = vset.pattern.permute.xlu0 0
    %201 = vperm.xlu0 %200, %v187
    %v202 = vpop.permute.xlu0 %201
    %vm203 = vcmp.eq.s32.totalorder %v101, %v202
    %v204 = vsel %vm203, %v186, 0.0
    %v205 = vsel %vm87, %v204, 0.0
    %206 = vadd.xlane.f32.xlu0 %v205
    %v207 = vpop.xlane.xlu0 %206
    %v208 = vsub.f32 %v199, %v207
    %v209 = vrot.slane %v208, 4
    %v210 = vadd.f32 %v208, %v209
    %v211 = vrot.slane %v210, 2
    %v212 = vadd.f32 %v210, %v211
    %v213 = vrot.slane %v212, 1
    %v214 = vadd.f32 %v212, %v213
    %v215 = vmul.f32 %v214, %v117
    %v216 = vmul.f32 %v215, 0.14285715
    %v217 = vadd.f32 %v185, %v216
    %v218 = vld [vmem:[%s5] sm:$0xff]
    %v219 = vld [vmem:[%s13] sm:$0xff]
    %v220 = vsel %vm87, %v218, -inf
    %221 = vmax.xlane.f32.xlu0 %v220
    %v222 = vpop.xlane.xlu0 %221
    %v223 = vsub.f32 %v218, %v222
    %v224 = vmul.f32 %v223, 1.442695
    %v225 = vpow.pop %v224
    %v226 = vsel %vm87, %v225, 0.0
    %227 = vadd.xlane.f32.xlu0 %v226
    %v228 = vpop.xlane.xlu0 %227
    %v229 = vlog2.pop %v228
    %v230 = vmul.f32 %v229, 0.6931472
    %v231 = vadd.f32 %v230, %v222
    %232 = vset.pattern.permute.xlu0 0
    %233 = vperm.xlu0 %232, %v219
    %v234 = vpop.permute.xlu0 %233
    %vm235 = vcmp.eq.s32.totalorder %v101, %v234
    %v236 = vsel %vm235, %v218, 0.0
    %v237 = vsel %vm87, %v236, 0.0
    %238 = vadd.xlane.f32.xlu0 %v237
    %v239 = vpop.xlane.xlu0 %238
    %v240 = vsub.f32 %v231, %v239
    %v241 = vrot.slane %v240, 4
    %v242 = vadd.f32 %v240, %v241
    %v243 = vrot.slane %v242, 2
    %v244 = vadd.f32 %v242, %v243
    %v245 = vrot.slane %v244, 1
    %v246 = vadd.f32 %v244, %v245
    %v247 = vmul.f32 %v246, %v117
    %v248 = vmul.f32 %v247, 0.14285715
    %v249 = vadd.f32 %v217, %v248
    %v250 = vld [vmem:[%s6] sm:$0xff]
    %v251 = vld [vmem:[%s14] sm:$0xff]
    %v252 = vsel %vm155, %v250, -inf
    %253 = vmax.xlane.f32.xlu0 %v252
    %v254 = vpop.xlane.xlu0 %253
    %v255 = vsub.f32 %v250, %v254
    %v256 = vmul.f32 %v255, 1.442695
    %v257 = vpow.pop %v256
    %v258 = vsel %vm155, %v257, 0.0
    %259 = vadd.xlane.f32.xlu0 %v258
    %v260 = vpop.xlane.xlu0 %259
    %v261 = vlog2.pop %v260
    %v262 = vmul.f32 %v261, 0.6931472
    %v263 = vadd.f32 %v262, %v254
    %264 = vset.pattern.permute.xlu0 0
    %265 = vperm.xlu0 %264, %v251
    %v266 = vpop.permute.xlu0 %265
    %vm267 = vcmp.eq.s32.totalorder %v101, %v266
    %v268 = vsel %vm267, %v250, 0.0
    %v269 = vsel %vm155, %v268, 0.0
    %270 = vadd.xlane.f32.xlu0 %v269
    %v271 = vpop.xlane.xlu0 %270
    %v272 = vsub.f32 %v263, %v271
    %v273 = vrot.slane %v272, 4
    %v274 = vadd.f32 %v272, %v273
    %v275 = vrot.slane %v274, 2
    %v276 = vadd.f32 %v274, %v275
    %v277 = vrot.slane %v276, 1
    %v278 = vadd.f32 %v276, %v277
    %v279 = vmul.f32 %v278, %v117
    %v280 = vmul.f32 %v279, 0.14285715
    %v281 = vadd.f32 %v249, %v280
    %v282 = vld [vmem:[%s7] sm:$0xff]
    %v283 = vld [vmem:[%s15] sm:$0xff]
    %vm284 = vcmask 130048
    %v285 = vsel %vm284, %v282, -inf
    %286 = vmax.xlane.f32.xlu0 %v285
    %v287 = vpop.xlane.xlu0 %286
    %v288 = vsub.f32 %v282, %v287
    %v289 = vmul.f32 %v288, 1.442695
    %v290 = vpow.pop %v289
    %v291 = vsel %vm284, %v290, 0.0
    %292 = vadd.xlane.f32.xlu0 %v291
    %v293 = vpop.xlane.xlu0 %292
    %v294 = vlog2.pop %v293
    %v295 = vmul.f32 %v294, 0.6931472
    %v296 = vadd.f32 %v295, %v287
    %297 = vset.pattern.permute.xlu0 0
    %298 = vperm.xlu0 %297, %v283
    %v299 = vpop.permute.xlu0 %298
    %vm300 = vcmp.eq.s32.totalorder %v101, %v299
    %v301 = vsel %vm300, %v282, 0.0
    %v302 = vsel %vm284, %v301, 0.0
    %303 = vadd.xlane.f32.xlu0 %v302
    %v304 = vpop.xlane.xlu0 %303
    %v305 = vsub.f32 %v296, %v304
    %v306 = vsel %vm284, %v282, 0.0
    %307 = vadd.xlane.f32.xlu0 %v306
    %v308 = vpop.xlane.xlu0 %307
    %v309 = vmul.f32 %v305, 0.9
    %v310 = vmul.f32 %v296, 16.0
    %v311 = vsub.f32 %v310, %v308
    %v312 = vmul.f32 %v311, 0.00625
    %v313 = vadd.f32 %v309, %v312
    %v314 = vrot.slane %v313, 4
    %v315 = vadd.f32 %v313, %v314
    %v316 = vrot.slane %v315, 2
    %v317 = vadd.f32 %v315, %v316
    %v318 = vrot.slane %v317, 1
    %v319 = vadd.f32 %v317, %v318
    %v320 = vmul.f32 %v319, %v117
    %v321 = vmul.f32 %v320, 0.5
    %v322 = vadd.f32 %v281, %v321
    %v323 = vld [vmem:[%s8] sm:$0xff]
    %v324 = vld [vmem:[%s16] sm:$0xff]
    %v325 = vsel %vm284, %v323, -inf
    %326 = vmax.xlane.f32.xlu0 %v325
    %v327 = vpop.xlane.xlu0 %326
    %v328 = vsub.f32 %v323, %v327
    %v329 = vmul.f32 %v328, 1.442695
    %v330 = vpow.pop %v329
    %v331 = vsel %vm284, %v330, 0.0
    %332 = vadd.xlane.f32.xlu0 %v331
    %v333 = vpop.xlane.xlu0 %332
    %v334 = vlog2.pop %v333
    %v335 = vmul.f32 %v334, 0.6931472
    %v336 = vadd.f32 %v335, %v327
    %337 = vset.pattern.permute.xlu0 0
    %338 = vperm.xlu0 %337, %v324
    %v339 = vpop.permute.xlu0 %338
    %vm340 = vcmp.eq.s32.totalorder %v101, %v339
    %v341 = vsel %vm340, %v323, 0.0
    %v342 = vsel %vm284, %v341, 0.0
    %343 = vadd.xlane.f32.xlu0 %v342
    %v344 = vpop.xlane.xlu0 %343
    %v345 = vsub.f32 %v336, %v344
    %v346 = vsel %vm284, %v323, 0.0
    %347 = vadd.xlane.f32.xlu0 %v346
    %v348 = vpop.xlane.xlu0 %347
    %v349 = vmul.f32 %v345, 0.9
    %v350 = vmul.f32 %v336, 16.0
    %v351 = vsub.f32 %v350, %v348
    %v352 = vmul.f32 %v351, 0.00625
    %v353 = vadd.f32 %v349, %v352
    %v354 = vrot.slane %v353, 4
    %v355 = vadd.f32 %v353, %v354
    %v356 = vrot.slane %v355, 2
    %v357 = vadd.f32 %v355, %v356
    %v358 = vrot.slane %v357, 1
    %v359 = vadd.f32 %v357, %v358
    %v360 = vmul.f32 %v359, %v117
    %v361 = vmul.f32 %v360, 0.5
    %v362 = vadd.f32 %v322, %v361
    %v363 = vld [vmem:[%s17] sm:$0xff]
    %v364 = vld [vmem:[%s18] sm:$0xff]
    %v365 = vcvt.s32.f32 %v364
    %v366 = vmax.f32 %v363, 0.0
    %v367 = vmul.f32 %v363, %v365
    %v368 = vsub.f32 %v366, %v367
    %v369 = vand.u32 2147483647, %v363
    %v370 = vsub.f32 0.0, %v369
    %v371 = vmul.f32 %v370, 1.442695
    %v372 = vpow.pop %v371
    %v373 = vadd.f32 %v372, 1.0
    %v374 = vlog2.pop %v373
    %v375 = vmul.f32 %v374, 0.6931472
    %v376 = vadd.f32 %v368, %v375
    %vm377 = vcmask 7168
    %v378 = vsel %vm377, %v376, 0.0
    %v379 = vrot.slane %v378, 4
    %v380 = vadd.f32 %v378, %v379
    %v381 = vrot.slane %v380, 2
    %v382 = vadd.f32 %v380, %v381
    %v383 = vrot.slane %v382, 1
    %v384 = vadd.f32 %v382, %v383
    %v385 = vmul.f32 %v384, %v117
    %v386 = vmul.f32 %v385, 0.14285715
    %v387 = vadd.f32 %v362, %v386
    %s388 = sld [smem:[#allocation2]]
    %v389 = vstv %s388
    %v390 = vmul.f32 %v389, 1.442695
    %v391 = vpow.pop %v390
    %v392 = vld [vmem:[%s19] sm:$0xff]
    %v393 = vld [vmem:[%s22] sm:$0xff]
    %vm394 = vcmask 261120
    %v396 = vsel %vm394, %v392, 0
    %v399 = vsel %vm394, %v393, 0
    %401 = vmatprep.subr.mxu0 0.0
    %402 = vmatpush1.xpose.msra.mxu0 %v399
    %403 = vmatprep.subr.mxu0 0.0
    %404 = vmatpush1.xpose.msra.mxu0 0.0
    %405 = vmatprep.subr.mxu0 0.0
    %406 = vmatpush1.xpose.msra.mxu0 0.0
    %407 = vmatprep.subr.mxu0 0.0
    %408 = vmatpush1.xpose.msra.mxu0 0.0
    %409 = vmatprep.subr.mxu0 0.0
    %410 = vmatpush1.xpose.msra.mxu0 0.0
    %411 = vmatprep.subr.mxu0 0.0
    %412 = vmatpush1.xpose.msra.mxu0 0.0
    %413 = vmatprep.subr.mxu0 0.0
    %414 = vmatpush1.xpose.msra.mxu0 0.0
    %415 = vmatprep.subr.mxu0 0.0
    %416 = vmatpush1.xpose.msra.mxu0 0.0
    %417 = vmatprep.subr.mxu0 0.0
    %418 = vmatpush1.xpose.msra.mxu0 0.0
    %419 = vmatprep.subr.mxu0 0.0
    %420 = vmatpush1.xpose.msra.mxu0 0.0
    %421 = vmatprep.subr.mxu0 0.0
    %422 = vmatpush1.xpose.msra.mxu0 0.0
    %423 = vmatprep.subr.mxu0 0.0
    %424 = vmatpush1.xpose.msra.mxu0 0.0
    %425 = vmatprep.subr.mxu0 0.0
    %426 = vmatpush1.xpose.msra.mxu0 0.0
    %427 = vmatprep.subr.mxu0 0.0
    %428 = vmatpush1.xpose.msra.mxu0 0.0
    %429 = vmatprep.subr.mxu0 0.0
    %430 = vmatpush1.xpose.msra.mxu0 0.0
    %431 = vmatprep.subr.mxu0 0.0
    %432 = vmatpush1.xpose.msra.mxu0 0.0
    %433 = vmatprep.subr.mxu0 0.0
    %434 = vmatpush1.xpose.msra.mxu0 0.0
    %435 = vmatprep.subr.mxu0 0.0
    %436 = vmatpush1.xpose.msra.mxu0 0.0
    %437 = vmatprep.subr.mxu0 0.0
    %438 = vmatpush1.xpose.msra.mxu0 0.0
    %439 = vmatprep.subr.mxu0 0.0
    %440 = vmatpush1.xpose.msra.mxu0 0.0
    %441 = vmatprep.subr.mxu0 0.0
    %442 = vmatpush1.xpose.msra.mxu0 0.0
    %443 = vmatprep.subr.mxu0 0.0
    %444 = vmatpush1.xpose.msra.mxu0 0.0
    %445 = vmatprep.subr.mxu0 0.0
    %446 = vmatpush1.xpose.msra.mxu0 0.0
    %447 = vmatprep.subr.mxu0 0.0
    %448 = vmatpush1.xpose.msra.mxu0 0.0
    %449 = vmatprep.subr.mxu0 0.0
    %450 = vmatpush1.xpose.msra.mxu0 0.0
    %451 = vmatprep.subr.mxu0 0.0
    %452 = vmatpush1.xpose.msra.mxu0 0.0
    %453 = vmatprep.subr.mxu0 0.0
    %454 = vmatpush1.xpose.msra.mxu0 0.0
    %455 = vmatprep.subr.mxu0 0.0
    %456 = vmatpush1.xpose.msra.mxu0 0.0
    %457 = vmatprep.subr.mxu0 0.0
    %458 = vmatpush1.xpose.msra.mxu0 0.0
    %459 = vmatprep.subr.mxu0 0.0
    %460 = vmatpush1.xpose.msra.mxu0 0.0
    %461 = vmatprep.subr.mxu0 0.0
    %462 = vmatpush1.xpose.msra.mxu0 0.0
    %463 = vmatprep.subr.mxu0 0.0
    %464 = vmatpush1.xpose.msra.mxu0 0.0
    %465 = vmatprep.mubr.f32.mxu0 0.0
    %466 = vmatmul.mubr.f32.gmra.mrb[0].mxu0 %v396
    %v467 = vpop.f32.mrb[0].mxu0
    %v468 = vadd.f32 0.0, %v467
    %v469 = vpop.f32.mrb[0].mxu0
    %470 = vdwg.mxu0
    %v471 = vmul.f32 %v391, %v468
    %v472 = vsel %vm87, %v471, -inf
    %473 = vmax.xlane.f32.xlu0 %v472
    %v474 = vpop.xlane.xlu0 %473
    %v475 = vsub.f32 %v471, %v474
    %v476 = vmul.f32 %v475, 1.442695
    %v477 = vpow.pop %v476
    %v478 = vsel %vm87, %v477, 0.0
    %479 = vadd.xlane.f32.xlu0 %v478
    %v480 = vpop.xlane.xlu0 %479
    %v481 = vlog2.pop %v480
    %v482 = vmul.f32 %v481, 0.6931472
    %v483 = vadd.f32 %v482, %v474
    %v484 = vrot.slane %v472, 4
    %v485 = vmax.f32 %v472, %v484
    %v486 = vrot.slane %v485, 2
    %v487 = vmax.f32 %v485, %v486
    %v488 = vrot.slane %v487, 1
    %v489 = vmax.f32 %v487, %v488
    %v490 = vsub.f32 %v471, %v489
    %v491 = vmul.f32 %v490, 1.442695
    %v492 = vpow.pop %v491
    %v493 = vsel %vm87, %v492, 0.0
    %v494 = vrot.slane %v493, 4
    %v495 = vadd.f32 %v493, %v494
    %v496 = vrot.slane %v495, 2
    %v497 = vadd.f32 %v495, %v496
    %v498 = vrot.slane %v497, 1
    %v499 = vadd.f32 %v497, %v498
    %v500 = vlog2.pop %v499
    %v501 = vmul.f32 %v500, 0.6931472
    %v502 = vadd.f32 %v501, %v489
    %v503 = vlaneseq
    %v504 = vshrl.u32 %v503, 7
    %vm505 = vcmp.eq.s32.totalorder %v504, %v101
    %v506 = vsel %vm505, %v471, 0.0
    %v507 = vsel %vm87, %v506, 0.0
    %508 = vadd.xlane.f32.xlu0 %v507
    %v509 = vpop.xlane.xlu0 %508
    %v510 = vrot.slane %v509, 4
    %v511 = vadd.f32 %v509, %v510
    %v512 = vrot.slane %v511, 2
    %v513 = vadd.f32 %v511, %v512
    %v514 = vrot.slane %v513, 1
    %v515 = vadd.f32 %v513, %v514
    %s516 = vtos %v515
    %v517 = vstv %s516
    %v518 = vmul.f32 %v517, %v117
    %v519 = vrot.slane %v483, 4
    %v520 = vadd.f32 %v483, %v519
    %v521 = vrot.slane %v520, 2
    %v522 = vadd.f32 %v520, %v521
    %v523 = vrot.slane %v522, 1
    %v524 = vadd.f32 %v522, %v523
    %v525 = vmul.f32 %v524, %v117
    %v526 = vsel %vm87, %v502, 0.0
    %527 = vadd.xlane.f32.xlu0 %v526
    %v528 = vpop.xlane.xlu0 %527
    %v529 = vmul.f32 %v528, %v117
    %v530 = vadd.f32 %v525, %v529
    %v531 = vmul.f32 %v530, 0.5
    %v532 = vsub.f32 %v531, %v518
    %v533 = vadd.f32 %v387, %v532
    %v534 = vld [vmem:[%s20] sm:$0xff]
    %v535 = vld [vmem:[%s23] sm:$0xff]
    %v537 = vsel %vm394, %v534, 0
    %v540 = vsel %vm394, %v535, 0
    %542 = vmatprep.subr.mxu0 0.0
    %543 = vmatpush1.xpose.msra.mxu0 %v540
    %544 = vmatprep.subr.mxu0 0.0
    %545 = vmatpush1.xpose.msra.mxu0 0.0
    %546 = vmatprep.subr.mxu0 0.0
    %547 = vmatpush1.xpose.msra.mxu0 0.0
    %548 = vmatprep.subr.mxu0 0.0
    %549 = vmatpush1.xpose.msra.mxu0 0.0
    %550 = vmatprep.subr.mxu0 0.0
    %551 = vmatpush1.xpose.msra.mxu0 0.0
    %552 = vmatprep.subr.mxu0 0.0
    %553 = vmatpush1.xpose.msra.mxu0 0.0
    %554 = vmatprep.subr.mxu0 0.0
    %555 = vmatpush1.xpose.msra.mxu0 0.0
    %556 = vmatprep.subr.mxu0 0.0
    %557 = vmatpush1.xpose.msra.mxu0 0.0
    %558 = vmatprep.subr.mxu0 0.0
    %559 = vmatpush1.xpose.msra.mxu0 0.0
    %560 = vmatprep.subr.mxu0 0.0
    %561 = vmatpush1.xpose.msra.mxu0 0.0
    %562 = vmatprep.subr.mxu0 0.0
    %563 = vmatpush1.xpose.msra.mxu0 0.0
    %564 = vmatprep.subr.mxu0 0.0
    %565 = vmatpush1.xpose.msra.mxu0 0.0
    %566 = vmatprep.subr.mxu0 0.0
    %567 = vmatpush1.xpose.msra.mxu0 0.0
    %568 = vmatprep.subr.mxu0 0.0
    %569 = vmatpush1.xpose.msra.mxu0 0.0
    %570 = vmatprep.subr.mxu0 0.0
    %571 = vmatpush1.xpose.msra.mxu0 0.0
    %572 = vmatprep.subr.mxu0 0.0
    %573 = vmatpush1.xpose.msra.mxu0 0.0
    %574 = vmatprep.subr.mxu0 0.0
    %575 = vmatpush1.xpose.msra.mxu0 0.0
    %576 = vmatprep.subr.mxu0 0.0
    %577 = vmatpush1.xpose.msra.mxu0 0.0
    %578 = vmatprep.subr.mxu0 0.0
    %579 = vmatpush1.xpose.msra.mxu0 0.0
    %580 = vmatprep.subr.mxu0 0.0
    %581 = vmatpush1.xpose.msra.mxu0 0.0
    %582 = vmatprep.subr.mxu0 0.0
    %583 = vmatpush1.xpose.msra.mxu0 0.0
    %584 = vmatprep.subr.mxu0 0.0
    %585 = vmatpush1.xpose.msra.mxu0 0.0
    %586 = vmatprep.subr.mxu0 0.0
    %587 = vmatpush1.xpose.msra.mxu0 0.0
    %588 = vmatprep.subr.mxu0 0.0
    %589 = vmatpush1.xpose.msra.mxu0 0.0
    %590 = vmatprep.subr.mxu0 0.0
    %591 = vmatpush1.xpose.msra.mxu0 0.0
    %592 = vmatprep.subr.mxu0 0.0
    %593 = vmatpush1.xpose.msra.mxu0 0.0
    %594 = vmatprep.subr.mxu0 0.0
    %595 = vmatpush1.xpose.msra.mxu0 0.0
    %596 = vmatprep.subr.mxu0 0.0
    %597 = vmatpush1.xpose.msra.mxu0 0.0
    %598 = vmatprep.subr.mxu0 0.0
    %599 = vmatpush1.xpose.msra.mxu0 0.0
    %600 = vmatprep.subr.mxu0 0.0
    %601 = vmatpush1.xpose.msra.mxu0 0.0
    %602 = vmatprep.subr.mxu0 0.0
    %603 = vmatpush1.xpose.msra.mxu0 0.0
    %604 = vmatprep.subr.mxu0 0.0
    %605 = vmatpush1.xpose.msra.mxu0 0.0
    %606 = vmatprep.mubr.f32.mxu0 0.0
    %607 = vmatmul.mubr.f32.gmra.mrb[0].mxu0 %v537
    %v608 = vpop.f32.mrb[0].mxu0
    %v609 = vadd.f32 0.0, %v608
    %v610 = vpop.f32.mrb[0].mxu0
    %611 = vdwg.mxu0
    %v612 = vmul.f32 %v391, %v609
    %v613 = vsel %vm87, %v612, -inf
    %614 = vmax.xlane.f32.xlu0 %v613
    %v615 = vpop.xlane.xlu0 %614
    %v616 = vsub.f32 %v612, %v615
    %v617 = vmul.f32 %v616, 1.442695
    %v618 = vpow.pop %v617
    %v619 = vsel %vm87, %v618, 0.0
    %620 = vadd.xlane.f32.xlu0 %v619
    %v621 = vpop.xlane.xlu0 %620
    %v622 = vlog2.pop %v621
    %v623 = vmul.f32 %v622, 0.6931472
    %v624 = vadd.f32 %v623, %v615
    %v625 = vrot.slane %v613, 4
    %v626 = vmax.f32 %v613, %v625
    %v627 = vrot.slane %v626, 2
    %v628 = vmax.f32 %v626, %v627
    %v629 = vrot.slane %v628, 1
    %v630 = vmax.f32 %v628, %v629
    %v631 = vsub.f32 %v612, %v630
    %v632 = vmul.f32 %v631, 1.442695
    %v633 = vpow.pop %v632
    %v634 = vsel %vm87, %v633, 0.0
    %v635 = vrot.slane %v634, 4
    %v636 = vadd.f32 %v634, %v635
    %v637 = vrot.slane %v636, 2
    %v638 = vadd.f32 %v636, %v637
    %v639 = vrot.slane %v638, 1
    %v640 = vadd.f32 %v638, %v639
    %v641 = vlog2.pop %v640
    %v642 = vmul.f32 %v641, 0.6931472
    %v643 = vadd.f32 %v642, %v630
    %v644 = vsel %vm505, %v612, 0.0
    %v645 = vsel %vm87, %v644, 0.0
    %646 = vadd.xlane.f32.xlu0 %v645
    %v647 = vpop.xlane.xlu0 %646
    %v648 = vrot.slane %v647, 4
    %v649 = vadd.f32 %v647, %v648
    %v650 = vrot.slane %v649, 2
    %v651 = vadd.f32 %v649, %v650
    %v652 = vrot.slane %v651, 1
    %v653 = vadd.f32 %v651, %v652
    %s654 = vtos %v653
    %v655 = vstv %s654
    %v656 = vmul.f32 %v655, %v117
    %v657 = vrot.slane %v624, 4
    %v658 = vadd.f32 %v624, %v657
    %v659 = vrot.slane %v658, 2
    %v660 = vadd.f32 %v658, %v659
    %v661 = vrot.slane %v660, 1
    %v662 = vadd.f32 %v660, %v661
    %v663 = vmul.f32 %v662, %v117
    %v664 = vsel %vm87, %v643, 0.0
    %665 = vadd.xlane.f32.xlu0 %v664
    %v666 = vpop.xlane.xlu0 %665
    %v667 = vmul.f32 %v666, %v117
    %v668 = vadd.f32 %v663, %v667
    %v669 = vmul.f32 %v668, 0.5
    %v670 = vsub.f32 %v669, %v656
    %v671 = vadd.f32 %v533, %v670
    %v672 = vld [vmem:[%s21] sm:$0xff]
    %v673 = vld [vmem:[%s24] sm:$0xff]
    %v675 = vsel %vm394, %v672, 0
    %v678 = vsel %vm394, %v673, 0
    %680 = vmatprep.subr.mxu0 0.0
    %681 = vmatpush1.xpose.msra.mxu0 %v678
    %682 = vmatprep.subr.mxu0 0.0
    %683 = vmatpush1.xpose.msra.mxu0 0.0
    %684 = vmatprep.subr.mxu0 0.0
    %685 = vmatpush1.xpose.msra.mxu0 0.0
    %686 = vmatprep.subr.mxu0 0.0
    %687 = vmatpush1.xpose.msra.mxu0 0.0
    %688 = vmatprep.subr.mxu0 0.0
    %689 = vmatpush1.xpose.msra.mxu0 0.0
    %690 = vmatprep.subr.mxu0 0.0
    %691 = vmatpush1.xpose.msra.mxu0 0.0
    %692 = vmatprep.subr.mxu0 0.0
    %693 = vmatpush1.xpose.msra.mxu0 0.0
    %694 = vmatprep.subr.mxu0 0.0
    %695 = vmatpush1.xpose.msra.mxu0 0.0
    %696 = vmatprep.subr.mxu0 0.0
    %697 = vmatpush1.xpose.msra.mxu0 0.0
    %698 = vmatprep.subr.mxu0 0.0
    %699 = vmatpush1.xpose.msra.mxu0 0.0
    %700 = vmatprep.subr.mxu0 0.0
    %701 = vmatpush1.xpose.msra.mxu0 0.0
    %702 = vmatprep.subr.mxu0 0.0
    %703 = vmatpush1.xpose.msra.mxu0 0.0
    %704 = vmatprep.subr.mxu0 0.0
    %705 = vmatpush1.xpose.msra.mxu0 0.0
    %706 = vmatprep.subr.mxu0 0.0
    %707 = vmatpush1.xpose.msra.mxu0 0.0
    %708 = vmatprep.subr.mxu0 0.0
    %709 = vmatpush1.xpose.msra.mxu0 0.0
    %710 = vmatprep.subr.mxu0 0.0
    %711 = vmatpush1.xpose.msra.mxu0 0.0
    %712 = vmatprep.subr.mxu0 0.0
    %713 = vmatpush1.xpose.msra.mxu0 0.0
    %714 = vmatprep.subr.mxu0 0.0
    %715 = vmatpush1.xpose.msra.mxu0 0.0
    %716 = vmatprep.subr.mxu0 0.0
    %717 = vmatpush1.xpose.msra.mxu0 0.0
    %718 = vmatprep.subr.mxu0 0.0
    %719 = vmatpush1.xpose.msra.mxu0 0.0
    %720 = vmatprep.subr.mxu0 0.0
    %721 = vmatpush1.xpose.msra.mxu0 0.0
    %722 = vmatprep.subr.mxu0 0.0
    %723 = vmatpush1.xpose.msra.mxu0 0.0
    %724 = vmatprep.subr.mxu0 0.0
    %725 = vmatpush1.xpose.msra.mxu0 0.0
    %726 = vmatprep.subr.mxu0 0.0
    %727 = vmatpush1.xpose.msra.mxu0 0.0
    %728 = vmatprep.subr.mxu0 0.0
    %729 = vmatpush1.xpose.msra.mxu0 0.0
    %730 = vmatprep.subr.mxu0 0.0
    %731 = vmatpush1.xpose.msra.mxu0 0.0
    %732 = vmatprep.subr.mxu0 0.0
    %733 = vmatpush1.xpose.msra.mxu0 0.0
    %734 = vmatprep.subr.mxu0 0.0
    %735 = vmatpush1.xpose.msra.mxu0 0.0
    %736 = vmatprep.subr.mxu0 0.0
    %737 = vmatpush1.xpose.msra.mxu0 0.0
    %738 = vmatprep.subr.mxu0 0.0
    %739 = vmatpush1.xpose.msra.mxu0 0.0
    %740 = vmatprep.subr.mxu0 0.0
    %741 = vmatpush1.xpose.msra.mxu0 0.0
    %742 = vmatprep.subr.mxu0 0.0
    %743 = vmatpush1.xpose.msra.mxu0 0.0
    %744 = vmatprep.mubr.f32.mxu0 0.0
    %745 = vmatmul.mubr.f32.gmra.mrb[0].mxu0 %v675
    %v746 = vpop.f32.mrb[0].mxu0
    %v747 = vadd.f32 0.0, %v746
    %v748 = vpop.f32.mrb[0].mxu0
    %749 = vdwg.mxu0
    %750 = vst.msk [vmem:[#allocation6] sm:$0xff] %vm87, %v747
    %v751 = vmul.f32 %v391, %v747
    %v752 = vsel %vm87, %v751, -inf
    %753 = vmax.xlane.f32.xlu0 %v752
    %v754 = vpop.xlane.xlu0 %753
    %v755 = vsub.f32 %v751, %v754
    %v756 = vmul.f32 %v755, 1.442695
    %v757 = vpow.pop %v756
    %v758 = vsel %vm87, %v757, 0.0
    %759 = vadd.xlane.f32.xlu0 %v758
    %v760 = vpop.xlane.xlu0 %759
    %v761 = vlog2.pop %v760
    %v762 = vmul.f32 %v761, 0.6931472
    %v763 = vadd.f32 %v762, %v754
    %v764 = vrot.slane %v752, 4
    %v765 = vmax.f32 %v752, %v764
    %v766 = vrot.slane %v765, 2
    %v767 = vmax.f32 %v765, %v766
    %v768 = vrot.slane %v767, 1
    %v769 = vmax.f32 %v767, %v768
    %v770 = vsub.f32 %v751, %v769
    %v771 = vmul.f32 %v770, 1.442695
    %v772 = vpow.pop %v771
    %v773 = vsel %vm87, %v772, 0.0
    %v774 = vrot.slane %v773, 4
    %v775 = vadd.f32 %v773, %v774
    %v776 = vrot.slane %v775, 2
    %v777 = vadd.f32 %v775, %v776
    %v778 = vrot.slane %v777, 1
    %v779 = vadd.f32 %v777, %v778
    %v780 = vlog2.pop %v779
    %v781 = vmul.f32 %v780, 0.6931472
    %v782 = vadd.f32 %v781, %v769
    %v783 = vsel %vm505, %v751, 0.0
    %v784 = vsel %vm87, %v783, 0.0
    %785 = vadd.xlane.f32.xlu0 %v784
    %v786 = vpop.xlane.xlu0 %785
    %v787 = vrot.slane %v786, 4
    %v788 = vadd.f32 %v786, %v787
    %v789 = vrot.slane %v788, 2
    %v790 = vadd.f32 %v788, %v789
    %v791 = vrot.slane %v790, 1
    %v792 = vadd.f32 %v790, %v791
    %s793 = vtos %v792
    %v794 = vstv %s793
    %v795 = vmul.f32 %v794, %v117
    %v796 = vrot.slane %v763, 4
    %v797 = vadd.f32 %v763, %v796
    %v798 = vrot.slane %v797, 2
    %v799 = vadd.f32 %v797, %v798
    %v800 = vrot.slane %v799, 1
    %v801 = vadd.f32 %v799, %v800
    %v802 = vmul.f32 %v801, %v117
    %v803 = vsel %vm87, %v782, 0.0
    %804 = vadd.xlane.f32.xlu0 %v803
    %v805 = vpop.xlane.xlu0 %804
    %v806 = vmul.f32 %v805, %v117
    %v807 = vadd.f32 %v802, %v806
    %v808 = vmul.f32 %v807, 0.5
    %v809 = vsub.f32 %v808, %v795
    %v810 = vadd.f32 %v671, %v809
    %v811 = vadd.f32 %v810, 0.0
    %s812 = vtos %v811
    %s813 = scalar_lea.smem [#allocation3], 0
    %814 = sst [smem:[%s813]] %s812
    // Predicated region
    $region102: #{_lambda_.1} parent=1 // pred_check
      _
    $region103: #{_lambda_.1} parent=1 // pred_check_branch
      %816 = sbr.rel (0) target = $region105
    $region104: #{_lambda_.1} parent=1 // pred_region
      %s818 = ssub.s32 16, 16
      %819 = vsyncadd [#allocation5], %s818
      %822 = dma.smem_to_hbm [#allocation3], 16, %s25, [#allocation5]
    $region105: #{_lambda_.1} parent=1 // pred_fallthru
      _
    // Predicated region
    $region106: #{_lambda_.1} parent=1 // pred_check
      _
    $region107: #{_lambda_.1} parent=1 // pred_check_branch
      %824 = sbr.rel (0) target = $region109
    $region108: #{_lambda_.1} parent=1 // pred_region
      %s826 = ssub.s32 128, 128
      %827 = vsyncadd [#allocation4], %s826
      %s829 = sshll.u32 [#allocation6], 4
      %s830 = int_to_ptr.vmem [resolvable:$true] %s829
      %832 = dma.vmem_to_hbm [thread:$0]  %s830, 128, %s26, [#allocation4]
    $region109: #{_lambda_.1} parent=1 // pred_fallthru
      _
    // Predicated region
    $region110: #{_lambda_.1} parent=1 // pred_check
      _
    $region111: #{_lambda_.1} parent=1 // pred_check_branch
      %834 = sbr.rel (0) target = $region113
    $region112: #{_lambda_.1} parent=1 // pred_region
      %835 = dma.done [#allocation5], 16
    $region113: #{_lambda_.1} parent=1 // pred_fallthru
      _
    // Predicated region
    $region114: #{_lambda_.1} parent=1 // pred_check
      _
    $region115: #{_lambda_.1} parent=1 // pred_check_branch
      %837 = sbr.rel (0) target = $region117
    $region116: #{_lambda_.1} parent=1 // pred_region
      %838 = dma.done [#allocation4], 128
    $region117: #{_lambda_.1} parent=1 // pred_fallthru
      _
    %839 = sfence
    %840 = vsyncpa [#allocation4], 1
    %841 = vsyncpa [#allocation5], 1

</llo_original>
